<compile_context>
chip_gen: v5e
topology: v5e:2x2
jax: 0.10.0
libtpu: 0.0.40
codegen_flags: <defaults>
</compile_context>

<pallas_src>
import functools

import numpy as np
import jax
import jax.numpy as jnp
from jax.experimental import pallas as pl
from jax.experimental.pallas import tpu as pltpu


# ----------------------------------------------------------------------------
# Problem constants (concrete DAG instance)
# ----------------------------------------------------------------------------
N, H, W = 2, 16, 16
CIN, C = 4, 8
WC_IN = W * CIN          # 64   input slab width (lane axis)
WC = W * C               # 128  hidden/output slab width (one full lane tile)
HP = H + 2               # 18   H with a 1-row zero halo on each side

LAYER_SPECS = [
    dict(kh=3, kw=3, cin=CIN, cout=C, relu=True),   # layer_0
    dict(kh=3, kw=3, cin=C,   cout=C, relu=True),   # layer_1
    dict(kh=3, kw=3, cin=C,   cout=C, relu=True),   # layer_2
    dict(kh=1, kw=1, cin=C,   cout=C, relu=False),  # layer_3
]
IN_LINKS = {0: [], 1: [0], 2: [1], 3: [0, 2]}
N_LAYERS = len(LAYER_SPECS)


# ----------------------------------------------------------------------------
# Fused Pallas kernel: whole DAG in one invocation, intermediates in VMEM
# ----------------------------------------------------------------------------
def fused_dag_kernel(xp_ref, b0_ref, b1_ref, b2_ref, b3_ref,
                     a0_ref, a1_ref, a2_ref, a3_ref,
                     o_ref, y0p_ref, y1p_ref):
    # xp_ref : (N, HP, W*CIN)  H-padded input slab
    # b0_ref : (3, W*CIN, W*C) band matrices for conv0 (one per kh)
    # b1_ref : (3, W*C,   W*C) band matrices for conv1
    # b2_ref : (3, W*C,   W*C) band matrices for conv2
    # b3_ref : (W*C, W*C)      block-diagonal matrix for the 1x1 conv
    # a*_ref : (1, W*C)        biases pre-tiled over W
    # o_ref  : (N, H, W*C)     final output slab
    # y0p_ref, y1p_ref : (N, HP, W*C) H-padded VMEM scratch for y[0], y[1]

    # Zero the padded scratch once; interiors are fully overwritten below,
    # so only the halo rows (which must be 0) matter.
    y0p_ref[...] = jnp.zeros((N, HP, WC), jnp.float32)
    y1p_ref[...] = jnp.zeros((N, HP, WC), jnp.float32)

    # Hoist bias broadcasts (done once, reused for both batch elements).
    bias0 = a0_ref[...]          # (1, WC)
    bias1 = a1_ref[...]
    bias2 = a2_ref[...]
    bias3 = a3_ref[...]

    def conv3x3(src_ref, band_ref, bias_row, n):
        # One "same" 3x3 conv for batch element n as 3 lane-dense matmuls.
        acc = jnp.zeros((H, WC), jnp.float32)
        for kh in range(3):                               # static, unrolled
            x_kh = src_ref[n, kh:kh + H, :]               # (H, K) shifted rows
            acc = acc + jnp.dot(x_kh, band_ref[kh],
                                preferred_element_type=jnp.float32)
        return jnp.maximum(acc + bias_row, 0.0)           # bias + ReLU

    for n in range(N):                                    # static batch loop
        # node 0: conv3x3(x) + ReLU
        y0 = conv3x3(xp_ref, b0_ref, bias0, n)            # (H, WC)
        y0p_ref[n, 1:H + 1, :] = y0
        # node 1: conv3x3(y0) + ReLU
        y1 = conv3x3(y0p_ref, b1_ref, bias1, n)
        y1p_ref[n, 1:H + 1, :] = y1
        # node 2: conv3x3(y1) + ReLU
        y2 = conv3x3(y1p_ref, b2_ref, bias2, n)
        # node 3: 1x1 conv on the skip sum (y0 + y2), no ReLU.
        s = y0 + y2                                        # free VPU add
        out = jnp.dot(s, b3_ref[...],
                      preferred_element_type=jnp.float32) + bias3
        o_ref[n] = out.astype(o_ref.dtype)                 # dense (16,128) store


def fused_forward(xp, b0, b1, b2, b3, a0, a1, a2, a3):
    return pl.pallas_call(
        fused_dag_kernel,
        out_shape=jax.ShapeDtypeStruct((N, H, WC), jnp.float32),
        in_specs=[pl.BlockSpec(memory_space=pltpu.VMEM)] * 9,
        out_specs=pl.BlockSpec(memory_space=pltpu.VMEM),
        scratch_shapes=[pltpu.VMEM((N, HP, WC), jnp.float32),
                        pltpu.VMEM((N, HP, WC), jnp.float32)],
    )(xp, b0, b1, b2, b3, a0, a1, a2, a3)


# ----------------------------------------------------------------------------
# Host-side parameter preparation (done once, plain numpy/JAX)
# ----------------------------------------------------------------------------
def _band_matrices(w4, width):
    """Fold the W-direction taps + SAME zero padding into band matrices.

    Returns B of shape (KH, width*Cin, width*Cout) with
      B[kh, wi*Cin+ci, wo*Cout+co] = w4[kh, wi-wo+KW//2, ci, co]  (0 elsewhere)
    so that  out[:, wo*Cout+co] = sum_kh  x_rows(kh) @ B[kh].
    """
    KH, KW, Cin, Cout = w4.shape
    w_np = np.asarray(w4, dtype=np.float32)
    band = np.zeros((KH, width * Cin, width * Cout), np.float32)
    for kh in range(KH):
        for kw in range(KW):
            dw = kw - (KW // 2)
            for wo in range(width):
                wi = wo + dw
                if 0 <= wi < width:
                    band[kh, wi * Cin:(wi + 1) * Cin,
                         wo * Cout:(wo + 1) * Cout] = w_np[kh, kw]
    return band


def prepare_params(params):
    (w0, b0), (w1, b1), (w2, b2), (w3, b3) = params
    B0 = jnp.asarray(_band_matrices(w0, W))          # (3,  64, 128)
    B1 = jnp.asarray(_band_matrices(w1, W))          # (3, 128, 128)
    B2 = jnp.asarray(_band_matrices(w2, W))          # (3, 128, 128)
    B3 = jnp.asarray(_band_matrices(w3, W)[0])       # (128, 128) block-diag

    def tile_bias(b):
        return jnp.asarray(np.tile(np.asarray(b, np.float32), W)[None, :])

    return (B0, B1, B2, B3,
            tile_bias(b0), tile_bias(b1), tile_bias(b2), tile_bias(b3))


def init_params(key):
    params = []
    for spec in LAYER_SPECS:
        key, kw_, kb_ = jax.random.split(key, 3)
        fan_in = spec["kh"] * spec["kw"] * spec["cin"]
        w = jax.random.normal(
            kw_, (spec["kh"], spec["kw"], spec["cin"], spec["cout"]),
            jnp.float32) * (1.0 / jnp.sqrt(float(fan_in)))
        b = jax.random.normal(kb_, (spec["cout"],), jnp.float32) * 0.1
        params.append((w, b))
    return params


# ----------------------------------------------------------------------------
# Forward pass (mirrors Architecture.forward for this DAG)
# ----------------------------------------------------------------------------
@functools.partial(jax.jit)
def architecture_forward(x_nchw, prepared):
    # NCHW -> NHWC -> lane-dense (N, H, W*CIN) slab, H-padded by 1.
    x = jnp.transpose(x_nchw, (0, 2, 3, 1)).reshape(N, H, WC_IN)
    xp = jnp.pad(x, ((0, 0), (1, 1), (0, 0)))
    out_slab = fused_forward(xp, *prepared)          # (N, H, W*C)
    out = out_slab.reshape(N, H, W, C)
    return jnp.transpose(out, (0, 3, 1, 2))          # back to NCHW


# ----------------------------------------------------------------------------
# Plain-JAX reference (lax.conv) for correctness check
# ----------------------------------------------------------------------------
def reference_forward(x_nchw, params):
    x = jnp.transpose(x_nchw, (0, 2, 3, 1))
    y = [None] * N_LAYERS

    def conv(xin, w, b, relu):
        out = jax.lax.conv_general_dilated(
            xin, w, window_strides=(1, 1), padding="SAME",
            dimension_numbers=("NHWC", "HWIO", "NHWC"))
        out = out + b[None, None, None, :]
        return jnp.maximum(out, 0.0) if relu else out

    y[0] = conv(x, *params[0], LAYER_SPECS[0]["relu"])
    for j in range(1, N_LAYERS):
        acc = sum(y[i] for i in IN_LINKS[j])
        y[j] = conv(acc, *params[j], LAYER_SPECS[j]["relu"])
    return jnp.transpose(y[-1], (0, 3, 1, 2))


if __name__ == "__main__":
    key = jax.random.PRNGKey(0)
    key, kx = jax.random.split(key)
    # batch=2, channels=4, spatial=16x16 (NCHW, PyTorch convention)
    x = jax.random.normal(kx, (N, CIN, H, W), jnp.float32)

    params = init_params(key)
    prepared = prepare_params(params)

    out = architecture_forward(x, prepared)
    out = jax.block_until_ready(out)

    ref = reference_forward(x, params)
    assert out.shape == (N, C, H, W), out.shape
    assert jnp.allclose(out, ref, rtol=1e-4, atol=1e-4), "mismatch vs reference"

    print("KERNEL_OK")
</pallas_src>

<mosaic_0001>
module attributes {stable_mosaic.version = 11 : i64} {
  func.func @fused_dag_kernel(%arg0: memref<2x18x64xf32, #tpu.memory_space<vmem>>, %arg1: memref<3x64x128xf32, #tpu.memory_space<vmem>>, %arg2: memref<3x128x128xf32, #tpu.memory_space<vmem>>, %arg3: memref<3x128x128xf32, #tpu.memory_space<vmem>>, %arg4: memref<128x128xf32, #tpu.memory_space<vmem>>, %arg5: memref<1x128xf32, #tpu.memory_space<vmem>>, %arg6: memref<1x128xf32, #tpu.memory_space<vmem>>, %arg7: memref<1x128xf32, #tpu.memory_space<vmem>>, %arg8: memref<1x128xf32, #tpu.memory_space<vmem>>, %arg9: memref<2x16x128xf32, #tpu.memory_space<vmem>>, %arg10: memref<2x18x128xf32, #tpu.memory_space<vmem>>, %arg11: memref<2x18x128xf32, #tpu.memory_space<vmem>>) attributes {dimension_semantics = [], scalar_prefetch = 0 : i64, scratch_operands = 2 : i64, tpu.core_type = #tpu.core_type<tc>} {
    %cst = arith.constant 0.000000e+00 : f32
    %0 = vector.broadcast %cst : f32 to vector<2x18x128xf32>
    %c0 = arith.constant 0 : index
    %c0_0 = arith.constant 0 : index
    %c0_1 = arith.constant 0 : index
    %1 = vector.load %arg10[%c0, %c0_0, %c0_1] : memref<2x18x128xf32, #tpu.memory_space<vmem>>, vector<2x18x128xf32>
    tpu.vector_store %arg10[%c0, %c0_0, %c0_1], %0 {strides = array<i32>} : memref<2x18x128xf32, #tpu.memory_space<vmem>>, vector<2x18x128xf32>,
    %cst_2 = arith.constant 0.000000e+00 : f32
    %2 = vector.broadcast %cst_2 : f32 to vector<2x18x128xf32>
    %c0_3 = arith.constant 0 : index
    %c0_4 = arith.constant 0 : index
    %c0_5 = arith.constant 0 : index
    %3 = vector.load %arg11[%c0_3, %c0_4, %c0_5] : memref<2x18x128xf32, #tpu.memory_space<vmem>>, vector<2x18x128xf32>
    tpu.vector_store %arg11[%c0_3, %c0_4, %c0_5], %2 {strides = array<i32>} : memref<2x18x128xf32, #tpu.memory_space<vmem>>, vector<2x18x128xf32>,
    %c0_6 = arith.constant 0 : index
    %c0_7 = arith.constant 0 : index
    %4 = vector.load %arg5[%c0_6, %c0_7] : memref<1x128xf32, #tpu.memory_space<vmem>>, vector<1x128xf32>
    %c0_8 = arith.constant 0 : index
    %c0_9 = arith.constant 0 : index
    %5 = vector.load %arg6[%c0_8, %c0_9] : memref<1x128xf32, #tpu.memory_space<vmem>>, vector<1x128xf32>
    %c0_10 = arith.constant 0 : index
    %c0_11 = arith.constant 0 : index
    %6 = vector.load %arg7[%c0_10, %c0_11] : memref<1x128xf32, #tpu.memory_space<vmem>>, vector<1x128xf32>
    %c0_12 = arith.constant 0 : index
    %c0_13 = arith.constant 0 : index
    %7 = vector.load %arg8[%c0_12, %c0_13] : memref<1x128xf32, #tpu.memory_space<vmem>>, vector<1x128xf32>
    %cst_14 = arith.constant 0.000000e+00 : f32
    %8 = vector.broadcast %cst_14 : f32 to vector<16x128xf32>
    %c0_15 = arith.constant 0 : index
    %c0_16 = arith.constant 0 : index
    %c0_17 = arith.constant 0 : index
    %9 = vector.load %arg0[%c0_15, %c0_16, %c0_17] : memref<2x18x64xf32, #tpu.memory_space<vmem>>, vector<1x16x64xf32>
    %10 = vector.shape_cast %9 : vector<1x16x64xf32> to vector<16x64xf32>
    %c0_18 = arith.constant 0 : index
    %c0_19 = arith.constant 0 : index
    %c0_20 = arith.constant 0 : index
    %11 = vector.load %arg1[%c0_18, %c0_19, %c0_20] : memref<3x64x128xf32, #tpu.memory_space<vmem>>, vector<1x64x128xf32>
    %12 = vector.shape_cast %11 : vector<1x64x128xf32> to vector<64x128xf32>
    %cst_21 = arith.constant dense<0.000000e+00> : vector<16x128xf32>
    %13 = tpu.matmul %10, %12, %cst_21 {dimension_numbers = #tpu.dot_dimension_numbers<[1], [0], [0], [1], [0, 0, 1, 1], [], []>} : vector<16x64xf32>, vector<64x128xf32>, vector<16x128xf32> -> vector<16x128xf32>
    %14 = arith.addf %8, %13 : vector<16x128xf32>
    %c0_22 = arith.constant 0 : index
    %c1 = arith.constant 1 : index
    %c0_23 = arith.constant 0 : index
    %15 = vector.load %arg0[%c0_22, %c1, %c0_23] : memref<2x18x64xf32, #tpu.memory_space<vmem>>, vector<1x16x64xf32>
    %16 = vector.shape_cast %15 : vector<1x16x64xf32> to vector<16x64xf32>
    %c1_24 = arith.constant 1 : index
    %c0_25 = arith.constant 0 : index
    %c0_26 = arith.constant 0 : index
    %17 = vector.load %arg1[%c1_24, %c0_25, %c0_26] : memref<3x64x128xf32, #tpu.memory_space<vmem>>, vector<1x64x128xf32>
    %18 = vector.shape_cast %17 : vector<1x64x128xf32> to vector<64x128xf32>
    %cst_27 = arith.constant dense<0.000000e+00> : vector<16x128xf32>
    %19 = tpu.matmul %16, %18, %cst_27 {dimension_numbers = #tpu.dot_dimension_numbers<[1], [0], [0], [1], [0, 0, 1, 1], [], []>} : vector<16x64xf32>, vector<64x128xf32>, vector<16x128xf32> -> vector<16x128xf32>
    %20 = arith.addf %14, %19 : vector<16x128xf32>
    %c0_28 = arith.constant 0 : index
    %c2 = arith.constant 2 : index
    %c0_29 = arith.constant 0 : index
    %21 = vector.load %arg0[%c0_28, %c2, %c0_29] : memref<2x18x64xf32, #tpu.memory_space<vmem>>, vector<1x16x64xf32>
    %22 = vector.shape_cast %21 : vector<1x16x64xf32> to vector<16x64xf32>
    %c2_30 = arith.constant 2 : index
    %c0_31 = arith.constant 0 : index
    %c0_32 = arith.constant 0 : index
    %23 = vector.load %arg1[%c2_30, %c0_31, %c0_32] : memref<3x64x128xf32, #tpu.memory_space<vmem>>, vector<1x64x128xf32>
    %24 = vector.shape_cast %23 : vector<1x64x128xf32> to vector<64x128xf32>
    %cst_33 = arith.constant dense<0.000000e+00> : vector<16x128xf32>
    %25 = tpu.matmul %22, %24, %cst_33 {dimension_numbers = #tpu.dot_dimension_numbers<[1], [0], [0], [1], [0, 0, 1, 1], [], []>} : vector<16x64xf32>, vector<64x128xf32>, vector<16x128xf32> -> vector<16x128xf32>
    %26 = arith.addf %20, %25 : vector<16x128xf32>
    %27 = vector.broadcast %4 : vector<1x128xf32> to vector<16x128xf32>
    %28 = arith.addf %26, %27 : vector<16x128xf32>
    %cst_34 = arith.constant 0.000000e+00 : f32
    %29 = vector.broadcast %cst_34 : f32 to vector<16x128xf32>
    %30 = arith.maximumf %28, %29 : vector<16x128xf32>
    %c0_35 = arith.constant 0 : index
    %c1_36 = arith.constant 1 : index
    %c0_37 = arith.constant 0 : index
    %31 = vector.load %arg10[%c0_35, %c1_36, %c0_37] : memref<2x18x128xf32, #tpu.memory_space<vmem>>, vector<1x16x128xf32>
    %32 = vector.shape_cast %31 : vector<1x16x128xf32> to vector<16x128xf32>
    %33 = vector.shape_cast %30 : vector<16x128xf32> to vector<1x16x128xf32>
    tpu.vector_store %arg10[%c0_35, %c1_36, %c0_37], %33 {strides = array<i32>} : memref<2x18x128xf32, #tpu.memory_space<vmem>>, vector<1x16x128xf32>,
    %cst_38 = arith.constant 0.000000e+00 : f32
    %34 = vector.broadcast %cst_38 : f32 to vector<16x128xf32>
    %c0_39 = arith.constant 0 : index
    %c0_40 = arith.constant 0 : index
    %c0_41 = arith.constant 0 : index
    %35 = vector.load %arg10[%c0_39, %c0_40, %c0_41] : memref<2x18x128xf32, #tpu.memory_space<vmem>>, vector<1x16x128xf32>
    %36 = vector.shape_cast %35 : vector<1x16x128xf32> to vector<16x128xf32>
    %c0_42 = arith.constant 0 : index
    %c0_43 = arith.constant 0 : index
    %c0_44 = arith.constant 0 : index
    %37 = vector.load %arg2[%c0_42, %c0_43, %c0_44] : memref<3x128x128xf32, #tpu.memory_space<vmem>>, vector<1x128x128xf32>
    %38 = vector.shape_cast %37 : vector<1x128x128xf32> to vector<128x128xf32>
    %cst_45 = arith.constant dense<0.000000e+00> : vector<16x128xf32>
    %39 = tpu.matmul %36, %38, %cst_45 {dimension_numbers = #tpu.dot_dimension_numbers<[1], [0], [0], [1], [0, 0, 1, 1], [], []>} : vector<16x128xf32>, vector<128x128xf32>, vector<16x128xf32> -> vector<16x128xf32>
    %40 = arith.addf %34, %39 : vector<16x128xf32>
    %c0_46 = arith.constant 0 : index
    %c1_47 = arith.constant 1 : index
    %c0_48 = arith.constant 0 : index
    %41 = vector.load %arg10[%c0_46, %c1_47, %c0_48] : memref<2x18x128xf32, #tpu.memory_space<vmem>>, vector<1x16x128xf32>
    %42 = vector.shape_cast %41 : vector<1x16x128xf32> to vector<16x128xf32>
    %c1_49 = arith.constant 1 : index
    %c0_50 = arith.constant 0 : index
    %c0_51 = arith.constant 0 : index
    %43 = vector.load %arg2[%c1_49, %c0_50, %c0_51] : memref<3x128x128xf32, #tpu.memory_space<vmem>>, vector<1x128x128xf32>
    %44 = vector.shape_cast %43 : vector<1x128x128xf32> to vector<128x128xf32>
    %cst_52 = arith.constant dense<0.000000e+00> : vector<16x128xf32>
    %45 = tpu.matmul %42, %44, %cst_52 {dimension_numbers = #tpu.dot_dimension_numbers<[1], [0], [0], [1], [0, 0, 1, 1], [], []>} : vector<16x128xf32>, vector<128x128xf32>, vector<16x128xf32> -> vector<16x128xf32>
    %46 = arith.addf %40, %45 : vector<16x128xf32>
    %c0_53 = arith.constant 0 : index
    %c2_54 = arith.constant 2 : index
    %c0_55 = arith.constant 0 : index
    %47 = vector.load %arg10[%c0_53, %c2_54, %c0_55] : memref<2x18x128xf32, #tpu.memory_space<vmem>>, vector<1x16x128xf32>
    %48 = vector.shape_cast %47 : vector<1x16x128xf32> to vector<16x128xf32>
    %c2_56 = arith.constant 2 : index
    %c0_57 = arith.constant 0 : index
    %c0_58 = arith.constant 0 : index
    %49 = vector.load %arg2[%c2_56, %c0_57, %c0_58] : memref<3x128x128xf32, #tpu.memory_space<vmem>>, vector<1x128x128xf32>
    %50 = vector.shape_cast %49 : vector<1x128x128xf32> to vector<128x128xf32>
    %cst_59 = arith.constant dense<0.000000e+00> : vector<16x128xf32>
    %51 = tpu.matmul %48, %50, %cst_59 {dimension_numbers = #tpu.dot_dimension_numbers<[1], [0], [0], [1], [0, 0, 1, 1], [], []>} : vector<16x128xf32>, vector<128x128xf32>, vector<16x128xf32> -> vector<16x128xf32>
    %52 = arith.addf %46, %51 : vector<16x128xf32>
    %53 = vector.broadcast %5 : vector<1x128xf32> to vector<16x128xf32>
    %54 = arith.addf %52, %53 : vector<16x128xf32>
    %cst_60 = arith.constant 0.000000e+00 : f32
    %55 = vector.broadcast %cst_60 : f32 to vector<16x128xf32>
    %56 = arith.maximumf %54, %55 : vector<16x128xf32>
    %c0_61 = arith.constant 0 : index
    %c1_62 = arith.constant 1 : index
    %c0_63 = arith.constant 0 : index
    %57 = vector.load %arg11[%c0_61, %c1_62, %c0_63] : memref<2x18x128xf32, #tpu.memory_space<vmem>>, vector<1x16x128xf32>
    %58 = vector.shape_cast %57 : vector<1x16x128xf32> to vector<16x128xf32>
    %59 = vector.shape_cast %56 : vector<16x128xf32> to vector<1x16x128xf32>
    tpu.vector_store %arg11[%c0_61, %c1_62, %c0_63], %59 {strides = array<i32>} : memref<2x18x128xf32, #tpu.memory_space<vmem>>, vector<1x16x128xf32>,
    %cst_64 = arith.constant 0.000000e+00 : f32
    %60 = vector.broadcast %cst_64 : f32 to vector<16x128xf32>
    %c0_65 = arith.constant 0 : index
    %c0_66 = arith.constant 0 : index
    %c0_67 = arith.constant 0 : index
    %61 = vector.load %arg11[%c0_65, %c0_66, %c0_67] : memref<2x18x128xf32, #tpu.memory_space<vmem>>, vector<1x16x128xf32>
    %62 = vector.shape_cast %61 : vector<1x16x128xf32> to vector<16x128xf32>
    %c0_68 = arith.constant 0 : index
    %c0_69 = arith.constant 0 : index
    %c0_70 = arith.constant 0 : index
    %63 = vector.load %arg3[%c0_68, %c0_69, %c0_70] : memref<3x128x128xf32, #tpu.memory_space<vmem>>, vector<1x128x128xf32>
    %64 = vector.shape_cast %63 : vector<1x128x128xf32> to vector<128x128xf32>
    %cst_71 = arith.constant dense<0.000000e+00> : vector<16x128xf32>
    %65 = tpu.matmul %62, %64, %cst_71 {dimension_numbers = #tpu.dot_dimension_numbers<[1], [0], [0], [1], [0, 0, 1, 1], [], []>} : vector<16x128xf32>, vector<128x128xf32>, vector<16x128xf32> -> vector<16x128xf32>
    %66 = arith.addf %60, %65 : vector<16x128xf32>
    %c0_72 = arith.constant 0 : index
    %c1_73 = arith.constant 1 : index
    %c0_74 = arith.constant 0 : index
    %67 = vector.load %arg11[%c0_72, %c1_73, %c0_74] : memref<2x18x128xf32, #tpu.memory_space<vmem>>, vector<1x16x128xf32>
    %68 = vector.shape_cast %67 : vector<1x16x128xf32> to vector<16x128xf32>
    %c1_75 = arith.constant 1 : index
    %c0_76 = arith.constant 0 : index
    %c0_77 = arith.constant 0 : index
    %69 = vector.load %arg3[%c1_75, %c0_76, %c0_77] : memref<3x128x128xf32, #tpu.memory_space<vmem>>, vector<1x128x128xf32>
    %70 = vector.shape_cast %69 : vector<1x128x128xf32> to vector<128x128xf32>
    %cst_78 = arith.constant dense<0.000000e+00> : vector<16x128xf32>
    %71 = tpu.matmul %68, %70, %cst_78 {dimension_numbers = #tpu.dot_dimension_numbers<[1], [0], [0], [1], [0, 0, 1, 1], [], []>} : vector<16x128xf32>, vector<128x128xf32>, vector<16x128xf32> -> vector<16x128xf32>
    %72 = arith.addf %66, %71 : vector<16x128xf32>
    %c0_79 = arith.constant 0 : index
    %c2_80 = arith.constant 2 : index
    %c0_81 = arith.constant 0 : index
    %73 = vector.load %arg11[%c0_79, %c2_80, %c0_81] : memref<2x18x128xf32, #tpu.memory_space<vmem>>, vector<1x16x128xf32>
    %74 = vector.shape_cast %73 : vector<1x16x128xf32> to vector<16x128xf32>
    %c2_82 = arith.constant 2 : index
    %c0_83 = arith.constant 0 : index
    %c0_84 = arith.constant 0 : index
    %75 = vector.load %arg3[%c2_82, %c0_83, %c0_84] : memref<3x128x128xf32, #tpu.memory_space<vmem>>, vector<1x128x128xf32>
    %76 = vector.shape_cast %75 : vector<1x128x128xf32> to vector<128x128xf32>
    %cst_85 = arith.constant dense<0.000000e+00> : vector<16x128xf32>
    %77 = tpu.matmul %74, %76, %cst_85 {dimension_numbers = #tpu.dot_dimension_numbers<[1], [0], [0], [1], [0, 0, 1, 1], [], []>} : vector<16x128xf32>, vector<128x128xf32>, vector<16x128xf32> -> vector<16x128xf32>
    %78 = arith.addf %72, %77 : vector<16x128xf32>
    %79 = vector.broadcast %6 : vector<1x128xf32> to vector<16x128xf32>
    %80 = arith.addf %78, %79 : vector<16x128xf32>
    %cst_86 = arith.constant 0.000000e+00 : f32
    %81 = vector.broadcast %cst_86 : f32 to vector<16x128xf32>
    %82 = arith.maximumf %80, %81 : vector<16x128xf32>
    %83 = arith.addf %30, %82 : vector<16x128xf32>
    %c0_87 = arith.constant 0 : index
    %c0_88 = arith.constant 0 : index
    %84 = vector.load %arg4[%c0_87, %c0_88] : memref<128x128xf32, #tpu.memory_space<vmem>>, vector<128x128xf32>
    %cst_89 = arith.constant dense<0.000000e+00> : vector<16x128xf32>
    %85 = tpu.matmul %83, %84, %cst_89 {dimension_numbers = #tpu.dot_dimension_numbers<[1], [0], [0], [1], [0, 0, 1, 1], [], []>} : vector<16x128xf32>, vector<128x128xf32>, vector<16x128xf32> -> vector<16x128xf32>
    %86 = vector.broadcast %7 : vector<1x128xf32> to vector<16x128xf32>
    %87 = arith.addf %85, %86 : vector<16x128xf32>
    %c0_90 = arith.constant 0 : index
    %c0_91 = arith.constant 0 : index
    %c0_92 = arith.constant 0 : index
    %88 = vector.load %arg9[%c0_90, %c0_91, %c0_92] : memref<2x16x128xf32, #tpu.memory_space<vmem>>, vector<1x16x128xf32>
    %89 = vector.shape_cast %88 : vector<1x16x128xf32> to vector<16x128xf32>
    %90 = vector.shape_cast %87 : vector<16x128xf32> to vector<1x16x128xf32>
    tpu.vector_store %arg9[%c0_90, %c0_91, %c0_92], %90 {strides = array<i32>} : memref<2x16x128xf32, #tpu.memory_space<vmem>>, vector<1x16x128xf32>,
    %cst_93 = arith.constant 0.000000e+00 : f32
    %91 = vector.broadcast %cst_93 : f32 to vector<16x128xf32>
    %c1_94 = arith.constant 1 : index
    %c0_95 = arith.constant 0 : index
    %c0_96 = arith.constant 0 : index
    %92 = vector.load %arg0[%c1_94, %c0_95, %c0_96] : memref<2x18x64xf32, #tpu.memory_space<vmem>>, vector<1x16x64xf32>
    %93 = vector.shape_cast %92 : vector<1x16x64xf32> to vector<16x64xf32>
    %c0_97 = arith.constant 0 : index
    %c0_98 = arith.constant 0 : index
    %c0_99 = arith.constant 0 : index
    %94 = vector.load %arg1[%c0_97, %c0_98, %c0_99] : memref<3x64x128xf32, #tpu.memory_space<vmem>>, vector<1x64x128xf32>
    %95 = vector.shape_cast %94 : vector<1x64x128xf32> to vector<64x128xf32>
    %cst_100 = arith.constant dense<0.000000e+00> : vector<16x128xf32>
    %96 = tpu.matmul %93, %95, %cst_100 {dimension_numbers = #tpu.dot_dimension_numbers<[1], [0], [0], [1], [0, 0, 1, 1], [], []>} : vector<16x64xf32>, vector<64x128xf32>, vector<16x128xf32> -> vector<16x128xf32>
    %97 = arith.addf %91, %96 : vector<16x128xf32>
    %c1_101 = arith.constant 1 : index
    %c1_102 = arith.constant 1 : index
    %c0_103 = arith.constant 0 : index
    %98 = vector.load %arg0[%c1_101, %c1_102, %c0_103] : memref<2x18x64xf32, #tpu.memory_space<vmem>>, vector<1x16x64xf32>
    %99 = vector.shape_cast %98 : vector<1x16x64xf32> to vector<16x64xf32>
    %c1_104 = arith.constant 1 : index
    %c0_105 = arith.constant 0 : index
    %c0_106 = arith.constant 0 : index
    %100 = vector.load %arg1[%c1_104, %c0_105, %c0_106] : memref<3x64x128xf32, #tpu.memory_space<vmem>>, vector<1x64x128xf32>
    %101 = vector.shape_cast %100 : vector<1x64x128xf32> to vector<64x128xf32>
    %cst_107 = arith.constant dense<0.000000e+00> : vector<16x128xf32>
    %102 = tpu.matmul %99, %101, %cst_107 {dimension_numbers = #tpu.dot_dimension_numbers<[1], [0], [0], [1], [0, 0, 1, 1], [], []>} : vector<16x64xf32>, vector<64x128xf32>, vector<16x128xf32> -> vector<16x128xf32>
    %103 = arith.addf %97, %102 : vector<16x128xf32>
    %c1_108 = arith.constant 1 : index
    %c2_109 = arith.constant 2 : index
    %c0_110 = arith.constant 0 : index
    %104 = vector.load %arg0[%c1_108, %c2_109, %c0_110] : memref<2x18x64xf32, #tpu.memory_space<vmem>>, vector<1x16x64xf32>
    %105 = vector.shape_cast %104 : vector<1x16x64xf32> to vector<16x64xf32>
    %c2_111 = arith.constant 2 : index
    %c0_112 = arith.constant 0 : index
    %c0_113 = arith.constant 0 : index
    %106 = vector.load %arg1[%c2_111, %c0_112, %c0_113] : memref<3x64x128xf32, #tpu.memory_space<vmem>>, vector<1x64x128xf32>
    %107 = vector.shape_cast %106 : vector<1x64x128xf32> to vector<64x128xf32>
    %cst_114 = arith.constant dense<0.000000e+00> : vector<16x128xf32>
    %108 = tpu.matmul %105, %107, %cst_114 {dimension_numbers = #tpu.dot_dimension_numbers<[1], [0], [0], [1], [0, 0, 1, 1], [], []>} : vector<16x64xf32>, vector<64x128xf32>, vector<16x128xf32> -> vector<16x128xf32>
    %109 = arith.addf %103, %108 : vector<16x128xf32>
    %110 = vector.broadcast %4 : vector<1x128xf32> to vector<16x128xf32>
    %111 = arith.addf %109, %110 : vector<16x128xf32>
    %cst_115 = arith.constant 0.000000e+00 : f32
    %112 = vector.broadcast %cst_115 : f32 to vector<16x128xf32>
    %113 = arith.maximumf %111, %112 : vector<16x128xf32>
    %c1_116 = arith.constant 1 : index
    %c1_117 = arith.constant 1 : index
    %c0_118 = arith.constant 0 : index
    %114 = vector.load %arg10[%c1_116, %c1_117, %c0_118] : memref<2x18x128xf32, #tpu.memory_space<vmem>>, vector<1x16x128xf32>
    %115 = vector.shape_cast %114 : vector<1x16x128xf32> to vector<16x128xf32>
    %116 = vector.shape_cast %113 : vector<16x128xf32> to vector<1x16x128xf32>
    tpu.vector_store %arg10[%c1_116, %c1_117, %c0_118], %116 {strides = array<i32>} : memref<2x18x128xf32, #tpu.memory_space<vmem>>, vector<1x16x128xf32>,
    %cst_119 = arith.constant 0.000000e+00 : f32
    %117 = vector.broadcast %cst_119 : f32 to vector<16x128xf32>
    %c1_120 = arith.constant 1 : index
    %c0_121 = arith.constant 0 : index
    %c0_122 = arith.constant 0 : index
    %118 = vector.load %arg10[%c1_120, %c0_121, %c0_122] : memref<2x18x128xf32, #tpu.memory_space<vmem>>, vector<1x16x128xf32>
    %119 = vector.shape_cast %118 : vector<1x16x128xf32> to vector<16x128xf32>
    %c0_123 = arith.constant 0 : index
    %c0_124 = arith.constant 0 : index
    %c0_125 = arith.constant 0 : index
    %120 = vector.load %arg2[%c0_123, %c0_124, %c0_125] : memref<3x128x128xf32, #tpu.memory_space<vmem>>, vector<1x128x128xf32>
    %121 = vector.shape_cast %120 : vector<1x128x128xf32> to vector<128x128xf32>
    %cst_126 = arith.constant dense<0.000000e+00> : vector<16x128xf32>
    %122 = tpu.matmul %119, %121, %cst_126 {dimension_numbers = #tpu.dot_dimension_numbers<[1], [0], [0], [1], [0, 0, 1, 1], [], []>} : vector<16x128xf32>, vector<128x128xf32>, vector<16x128xf32> -> vector<16x128xf32>
    %123 = arith.addf %117, %122 : vector<16x128xf32>
    %c1_127 = arith.constant 1 : index
    %c1_128 = arith.constant 1 : index
    %c0_129 = arith.constant 0 : index
    %124 = vector.load %arg10[%c1_127, %c1_128, %c0_129] : memref<2x18x128xf32, #tpu.memory_space<vmem>>, vector<1x16x128xf32>
    %125 = vector.shape_cast %124 : vector<1x16x128xf32> to vector<16x128xf32>
    %c1_130 = arith.constant 1 : index
    %c0_131 = arith.constant 0 : index
    %c0_132 = arith.constant 0 : index
    %126 = vector.load %arg2[%c1_130, %c0_131, %c0_132] : memref<3x128x128xf32, #tpu.memory_space<vmem>>, vector<1x128x128xf32>
    %127 = vector.shape_cast %126 : vector<1x128x128xf32> to vector<128x128xf32>
    %cst_133 = arith.constant dense<0.000000e+00> : vector<16x128xf32>
    %128 = tpu.matmul %125, %127, %cst_133 {dimension_numbers = #tpu.dot_dimension_numbers<[1], [0], [0], [1], [0, 0, 1, 1], [], []>} : vector<16x128xf32>, vector<128x128xf32>, vector<16x128xf32> -> vector<16x128xf32>
    %129 = arith.addf %123, %128 : vector<16x128xf32>
    %c1_134 = arith.constant 1 : index
    %c2_135 = arith.constant 2 : index
    %c0_136 = arith.constant 0 : index
    %130 = vector.load %arg10[%c1_134, %c2_135, %c0_136] : memref<2x18x128xf32, #tpu.memory_space<vmem>>, vector<1x16x128xf32>
    %131 = vector.shape_cast %130 : vector<1x16x128xf32> to vector<16x128xf32>
    %c2_137 = arith.constant 2 : index
    %c0_138 = arith.constant 0 : index
    %c0_139 = arith.constant 0 : index
    %132 = vector.load %arg2[%c2_137, %c0_138, %c0_139] : memref<3x128x128xf32, #tpu.memory_space<vmem>>, vector<1x128x128xf32>
    %133 = vector.shape_cast %132 : vector<1x128x128xf32> to vector<128x128xf32>
    %cst_140 = arith.constant dense<0.000000e+00> : vector<16x128xf32>
    %134 = tpu.matmul %131, %133, %cst_140 {dimension_numbers = #tpu.dot_dimension_numbers<[1], [0], [0], [1], [0, 0, 1, 1], [], []>} : vector<16x128xf32>, vector<128x128xf32>, vector<16x128xf32> -> vector<16x128xf32>
    %135 = arith.addf %129, %134 : vector<16x128xf32>
    %136 = vector.broadcast %5 : vector<1x128xf32> to vector<16x128xf32>
    %137 = arith.addf %135, %136 : vector<16x128xf32>
    %cst_141 = arith.constant 0.000000e+00 : f32
    %138 = vector.broadcast %cst_141 : f32 to vector<16x128xf32>
    %139 = arith.maximumf %137, %138 : vector<16x128xf32>
    %c1_142 = arith.constant 1 : index
    %c1_143 = arith.constant 1 : index
    %c0_144 = arith.constant 0 : index
    %140 = vector.load %arg11[%c1_142, %c1_143, %c0_144] : memref<2x18x128xf32, #tpu.memory_space<vmem>>, vector<1x16x128xf32>
    %141 = vector.shape_cast %140 : vector<1x16x128xf32> to vector<16x128xf32>
    %142 = vector.shape_cast %139 : vector<16x128xf32> to vector<1x16x128xf32>
    tpu.vector_store %arg11[%c1_142, %c1_143, %c0_144], %142 {strides = array<i32>} : memref<2x18x128xf32, #tpu.memory_space<vmem>>, vector<1x16x128xf32>,
    %cst_145 = arith.constant 0.000000e+00 : f32
    %143 = vector.broadcast %cst_145 : f32 to vector<16x128xf32>
    %c1_146 = arith.constant 1 : index
    %c0_147 = arith.constant 0 : index
    %c0_148 = arith.constant 0 : index
    %144 = vector.load %arg11[%c1_146, %c0_147, %c0_148] : memref<2x18x128xf32, #tpu.memory_space<vmem>>, vector<1x16x128xf32>
    %145 = vector.shape_cast %144 : vector<1x16x128xf32> to vector<16x128xf32>
    %c0_149 = arith.constant 0 : index
    %c0_150 = arith.constant 0 : index
    %c0_151 = arith.constant 0 : index
    %146 = vector.load %arg3[%c0_149, %c0_150, %c0_151] : memref<3x128x128xf32, #tpu.memory_space<vmem>>, vector<1x128x128xf32>
    %147 = vector.shape_cast %146 : vector<1x128x128xf32> to vector<128x128xf32>
    %cst_152 = arith.constant dense<0.000000e+00> : vector<16x128xf32>
    %148 = tpu.matmul %145, %147, %cst_152 {dimension_numbers = #tpu.dot_dimension_numbers<[1], [0], [0], [1], [0, 0, 1, 1], [], []>} : vector<16x128xf32>, vector<128x128xf32>, vector<16x128xf32> -> vector<16x128xf32>
    %149 = arith.addf %143, %148 : vector<16x128xf32>
    %c1_153 = arith.constant 1 : index
    %c1_154 = arith.constant 1 : index
    %c0_155 = arith.constant 0 : index
    %150 = vector.load %arg11[%c1_153, %c1_154, %c0_155] : memref<2x18x128xf32, #tpu.memory_space<vmem>>, vector<1x16x128xf32>
    %151 = vector.shape_cast %150 : vector<1x16x128xf32> to vector<16x128xf32>
    %c1_156 = arith.constant 1 : index
    %c0_157 = arith.constant 0 : index
    %c0_158 = arith.constant 0 : index
    %152 = vector.load %arg3[%c1_156, %c0_157, %c0_158] : memref<3x128x128xf32, #tpu.memory_space<vmem>>, vector<1x128x128xf32>
    %153 = vector.shape_cast %152 : vector<1x128x128xf32> to vector<128x128xf32>
    %cst_159 = arith.constant dense<0.000000e+00> : vector<16x128xf32>
    %154 = tpu.matmul %151, %153, %cst_159 {dimension_numbers = #tpu.dot_dimension_numbers<[1], [0], [0], [1], [0, 0, 1, 1], [], []>} : vector<16x128xf32>, vector<128x128xf32>, vector<16x128xf32> -> vector<16x128xf32>
    %155 = arith.addf %149, %154 : vector<16x128xf32>
    %c1_160 = arith.constant 1 : index
    %c2_161 = arith.constant 2 : index
    %c0_162 = arith.constant 0 : index
    %156 = vector.load %arg11[%c1_160, %c2_161, %c0_162] : memref<2x18x128xf32, #tpu.memory_space<vmem>>, vector<1x16x128xf32>
    %157 = vector.shape_cast %156 : vector<1x16x128xf32> to vector<16x128xf32>
    %c2_163 = arith.constant 2 : index
    %c0_164 = arith.constant 0 : index
    %c0_165 = arith.constant 0 : index
    %158 = vector.load %arg3[%c2_163, %c0_164, %c0_165] : memref<3x128x128xf32, #tpu.memory_space<vmem>>, vector<1x128x128xf32>
    %159 = vector.shape_cast %158 : vector<1x128x128xf32> to vector<128x128xf32>
    %cst_166 = arith.constant dense<0.000000e+00> : vector<16x128xf32>
    %160 = tpu.matmul %157, %159, %cst_166 {dimension_numbers = #tpu.dot_dimension_numbers<[1], [0], [0], [1], [0, 0, 1, 1], [], []>} : vector<16x128xf32>, vector<128x128xf32>, vector<16x128xf32> -> vector<16x128xf32>
    %161 = arith.addf %155, %160 : vector<16x128xf32>
    %162 = vector.broadcast %6 : vector<1x128xf32> to vector<16x128xf32>
    %163 = arith.addf %161, %162 : vector<16x128xf32>
    %cst_167 = arith.constant 0.000000e+00 : f32
    %164 = vector.broadcast %cst_167 : f32 to vector<16x128xf32>
    %165 = arith.maximumf %163, %164 : vector<16x128xf32>
    %166 = arith.addf %113, %165 : vector<16x128xf32>
    %c0_168 = arith.constant 0 : index
    %c0_169 = arith.constant 0 : index
    %167 = vector.load %arg4[%c0_168, %c0_169] : memref<128x128xf32, #tpu.memory_space<vmem>>, vector<128x128xf32>
    %cst_170 = arith.constant dense<0.000000e+00> : vector<16x128xf32>
    %168 = tpu.matmul %166, %167, %cst_170 {dimension_numbers = #tpu.dot_dimension_numbers<[1], [0], [0], [1], [0, 0, 1, 1], [], []>} : vector<16x128xf32>, vector<128x128xf32>, vector<16x128xf32> -> vector<16x128xf32>
    %169 = vector.broadcast %7 : vector<1x128xf32> to vector<16x128xf32>
    %170 = arith.addf %168, %169 : vector<16x128xf32>
    %c1_171 = arith.constant 1 : index
    %c0_172 = arith.constant 0 : index
    %c0_173 = arith.constant 0 : index
    %171 = vector.load %arg9[%c1_171, %c0_172, %c0_173] : memref<2x16x128xf32, #tpu.memory_space<vmem>>, vector<1x16x128xf32>
    %172 = vector.shape_cast %171 : vector<1x16x128xf32> to vector<16x128xf32>
    %173 = vector.shape_cast %170 : vector<16x128xf32> to vector<1x16x128xf32>
    tpu.vector_store %arg9[%c1_171, %c0_172, %c0_173], %173 {strides = array<i32>} : memref<2x16x128xf32, #tpu.memory_space<vmem>>, vector<1x16x128xf32>,
    return
  }
}

</mosaic_0001>

<llo_original>
// kernel: architecture_forward.1
$region0: #{architecture_forward.1}
  #allocation0 [shape = 'u32[]', space=smem, size = 0x4, offset = 0x4, fixed_abs, tag = 'smem constant byte address 0x4 - core index']
  #allocation1 [shape = 'u32[72,128]{1,0:T(1,128)}', space=vmem, size = 0x9000, scoped, tag = 'internal scratch']
  #allocation2 [shape = 'f32[2,18,128]{2,1,0:T(8,128)}', space=vmem, size = 0x6000, scoped, tag = 'scratch operand']
  #allocation3 [shape = 'f32[2,18,128]{2,1,0:T(8,128)}', space=vmem, size = 0x6000, scoped, tag = 'scratch operand']
  %s0 = inlined_call_operand.vmem [shape: f32[2,18,64], index: 0, kind: input, shape index: {}]
  %s1 = inlined_call_operand.hbm [shape: f32[3,64,128], index: 1, kind: input, shape index: {}]
  %s2 = inlined_call_operand.vmem [shape: f32[3,128,128], index: 2, kind: input, shape index: {}]
  %s3 = inlined_call_operand.hbm [shape: f32[3,128,128], index: 3, kind: input, shape index: {}]
  %s4 = inlined_call_operand.hbm [shape: f32[128,128], index: 4, kind: input, shape index: {}]
  %s5 = inlined_call_operand.vmem [shape: f32[1,128], index: 5, kind: input, shape index: {}]
  %s6 = inlined_call_operand.vmem [shape: f32[1,128], index: 6, kind: input, shape index: {}]
  %s7 = inlined_call_operand.vmem [shape: f32[1,128], index: 7, kind: input, shape index: {}]
  %s8 = inlined_call_operand.vmem [shape: f32[1,128], index: 8, kind: input, shape index: {}]
  %s9 = inlined_call_operand.vmem [shape: f32[2,16,128], index: 9, kind: output, shape index: {}]
  %s10 = sld [smem:[#allocation0]]
  $region58: #{architecture_forward.1} parent=0
    _
  %s12 = ssub.s32 1, %s10
  %s13 = scalar_select 0, %s12, %s10
  $region1: #{architecture_forward.1} parent=0
    #allocation4 [shape = 'u8[98304]{0}', space=vmem, size = 0x18000, scoped, tag = 'input window, operand 1, single buffered']
    #allocation5 [shape = 's32[1]{0}', space=sflag, size = 0x4, scoped, tag = 'scoped memory for architecture_forward.1']
    #allocation6 [shape = 'u8[196608]{0}', space=vmem, size = 0x30000, scoped, tag = 'input window, operand 3, single buffered']
    #allocation7 [shape = 's32[1]{0}', space=sflag, size = 0x4, scoped, tag = 'scoped memory for architecture_forward.1']
    #allocation8 [shape = 'u8[65536]{0}', space=vmem, size = 0x10000, scoped, tag = 'input window, operand 4, single buffered']
    %14 = vsyncpa [#allocation5], 0
    %15 = vsyncpa [#allocation7], 0
    // Predicated region
    $region2: #{architecture_forward.1} parent=1 // pred_check
      _
    $region3: #{architecture_forward.1} parent=1 // pred_check_branch
      %17 = sbr.rel (0) target = $region5
    $region4: #{architecture_forward.1} parent=1 // pred_region
      _
    $region5: #{architecture_forward.1} parent=1 // pred_fallthru
      _
    // Predicated region
    $region6: #{architecture_forward.1} parent=1 // pred_check
      _
    $region7: #{architecture_forward.1} parent=1 // pred_check_branch
      %19 = sbr.rel (0) target = $region9
    $region8: #{architecture_forward.1} parent=1 // pred_region
      %21 = vsyncadd [#allocation5], 0
      %s22 = sshll.u32 %s1, 4
      %s23 = int_to_ptr.hbm [resolvable:$true] %s22
      %s24 = sshll.u32 [#allocation4], 4
      %s25 = int_to_ptr.vmem [resolvable:$true] %s24
      %30 = dma.hbm_to_vmem [thread:$0]  %s23, 3072, %s25, [#allocation5], 128, 128, 8
    $region9: #{architecture_forward.1} parent=1 // pred_fallthru
      _
    // Predicated region
    $region10: #{architecture_forward.1} parent=1 // pred_check
      _
    $region11: #{architecture_forward.1} parent=1 // pred_check_branch
      %32 = sbr.rel (0) target = $region13
    $region12: #{architecture_forward.1} parent=1 // pred_region
      _
    $region13: #{architecture_forward.1} parent=1 // pred_fallthru
      _
    // Predicated region
    $region14: #{architecture_forward.1} parent=1 // pred_check
      _
    $region15: #{architecture_forward.1} parent=1 // pred_check_branch
      %34 = sbr.rel (0) target = $region17
    $region16: #{architecture_forward.1} parent=1 // pred_region
      %36 = vsyncadd [#allocation7], 0
      %s37 = sshll.u32 %s3, 4
      %s38 = int_to_ptr.hbm [resolvable:$true] %s37
      %s39 = sshll.u32 [#allocation6], 4
      %s40 = int_to_ptr.vmem [resolvable:$true] %s39
      %45 = dma.hbm_to_vmem [thread:$0]  %s38, 6144, %s40, [#allocation7], 128, 128, 8
    $region17: #{architecture_forward.1} parent=1 // pred_fallthru
      _
    // Predicated region
    $region18: #{architecture_forward.1} parent=1 // pred_check
      _
    $region19: #{architecture_forward.1} parent=1 // pred_check_branch
      %47 = sbr.rel (0) target = $region21
    $region20: #{architecture_forward.1} parent=1 // pred_region
      %49 = vsyncadd [#allocation7], 0
      %s50 = sshll.u32 %s4, 4
      %s51 = int_to_ptr.hbm [resolvable:$true] %s50
      %s52 = sshll.u32 [#allocation8], 4
      %s53 = int_to_ptr.vmem [resolvable:$true] %s52
      %58 = dma.hbm_to_vmem [thread:$0]  %s51, 2048, %s53, [#allocation7], 128, 128, 8
    $region21: #{architecture_forward.1} parent=1 // pred_fallthru
      _
    // Predicated region
    $region22: #{architecture_forward.1} parent=1 // pred_check
      _
    $region23: #{architecture_forward.1} parent=1 // pred_check_branch
      %60 = sbr.rel (0) target = $region25
    $region24: #{architecture_forward.1} parent=1 // pred_region
      _
    $region25: #{architecture_forward.1} parent=1 // pred_fallthru
      _
    // Predicated region
    $region26: #{architecture_forward.1} parent=1 // pred_check
      _
    $region27: #{architecture_forward.1} parent=1 // pred_check_branch
      %62 = sbr.rel (0) target = $region29
    $region28: #{architecture_forward.1} parent=1 // pred_region
      _
    $region29: #{architecture_forward.1} parent=1 // pred_fallthru
      _
    // Predicated region
    $region30: #{architecture_forward.1} parent=1 // pred_check
      _
    $region31: #{architecture_forward.1} parent=1 // pred_check_branch
      %64 = sbr.rel (0) target = $region33
    $region32: #{architecture_forward.1} parent=1 // pred_region
      _
    $region33: #{architecture_forward.1} parent=1 // pred_fallthru
      _
    // Predicated region
    $region34: #{architecture_forward.1} parent=1 // pred_check
      _
    $region35: #{architecture_forward.1} parent=1 // pred_check_branch
      %66 = sbr.rel (0) target = $region37
    $region36: #{architecture_forward.1} parent=1 // pred_region
      _
    $region37: #{architecture_forward.1} parent=1 // pred_fallthru
      _
    // Predicated region
    $region38: #{architecture_forward.1} parent=1 // pred_check
      _
    $region39: #{architecture_forward.1} parent=1 // pred_check_branch
      %68 = sbr.rel (0) target = $region41
    $region40: #{architecture_forward.1} parent=1 // pred_region
      %70 = dma.done [#allocation5], 3072
    $region41: #{architecture_forward.1} parent=1 // pred_fallthru
      _
    // Predicated region
    $region42: #{architecture_forward.1} parent=1 // pred_check
      _
    $region43: #{architecture_forward.1} parent=1 // pred_check_branch
      %72 = sbr.rel (0) target = $region45
    $region44: #{architecture_forward.1} parent=1 // pred_region
      %74 = dma.done [#allocation7], 6144
    $region45: #{architecture_forward.1} parent=1 // pred_fallthru
      _
    // Predicated region
    $region46: #{architecture_forward.1} parent=1 // pred_check
      _
    $region47: #{architecture_forward.1} parent=1 // pred_check_branch
      %76 = sbr.rel (0) target = $region49
    $region48: #{architecture_forward.1} parent=1 // pred_region
      %78 = dma.done [#allocation7], 2048
    $region49: #{architecture_forward.1} parent=1 // pred_fallthru
      _
    %79 = vst [vmem:[#allocation2] sm:$0xff] 0.0
    %80 = vst [vmem:[#allocation2 + $0x8] sm:$0xff] 0.0
    %81 = vst [vmem:[#allocation2 + $0x10] sm:$0x3] 0.0
    %82 = vst [vmem:[#allocation2 + $0x18] sm:$0xff] 0.0
    %83 = vst [vmem:[#allocation2 + $0x20] sm:$0xff] 0.0
    %84 = vst [vmem:[#allocation2 + $0x28] sm:$0x3] 0.0
    %85 = vst [vmem:[#allocation3] sm:$0xff] 0.0
    %86 = vst [vmem:[#allocation3 + $0x8] sm:$0xff] 0.0
    %87 = vst [vmem:[#allocation3 + $0x10] sm:$0x3] 0.0
    %88 = vst [vmem:[#allocation3 + $0x18] sm:$0xff] 0.0
    %89 = vst [vmem:[#allocation3 + $0x20] sm:$0xff] 0.0
    %90 = vst [vmem:[#allocation3 + $0x28] sm:$0x3] 0.0
    %v91 = vld [vmem:[%s5] sm:$0x1]
    %v92 = vld [vmem:[%s6] sm:$0x1]
    %v93 = vld [vmem:[%s7] sm:$0x1]
    %v94 = vld [vmem:[%s8] sm:$0x1]
    %v95 = vld [vmem:[%s0] sm:$0xff]
    %v96 = vld [vmem:[%s0 + $0x8] sm:$0xff]
    %v97 = vld [vmem:[#allocation4] sm:$0xff]
    %v98 = vld [vmem:[#allocation4 + $0x8] sm:$0xff]
    %v99 = vld [vmem:[#allocation4 + $0x10] sm:$0xff]
    %v100 = vld [vmem:[#allocation4 + $0x18] sm:$0xff]
    %v101 = vld [vmem:[#allocation4 + $0x20] sm:$0xff]
    %v102 = vld [vmem:[#allocation4 + $0x28] sm:$0xff]
    %v103 = vld [vmem:[#allocation4 + $0x30] sm:$0xff]
    %v104 = vld [vmem:[#allocation4 + $0x38] sm:$0xff]
    %v105 = vld [vmem:[%s0 + $0x1] sm:$0xff]
    %v106 = vld [vmem:[%s0 + $0x9] sm:$0xff]
    %s107 = scalar_lea.vmem [#allocation4], 64
    %v108 = vld [vmem:[%s107] sm:$0xff]
    %v109 = vld [vmem:[%s107 + $0x8] sm:$0xff]
    %v110 = vld [vmem:[%s107 + $0x10] sm:$0xff]
    %v111 = vld [vmem:[%s107 + $0x18] sm:$0xff]
    %v112 = vld [vmem:[%s107 + $0x20] sm:$0xff]
    %v113 = vld [vmem:[%s107 + $0x28] sm:$0xff]
    %v114 = vld [vmem:[%s107 + $0x30] sm:$0xff]
    %v115 = vld [vmem:[%s107 + $0x38] sm:$0xff]
    %vm116 = vcmask 523264
    %v118 = vsel %vm116, %v105, 0
    %v121 = vsel %vm116, %v106, 0
    %123 = vmatpush.msra.mxu0 0.0
    %124 = vmatpush.msra.mxu0 0.0
    %125 = vmatpush.msra.mxu0 0.0
    %126 = vmatpush.msra.mxu0 0.0
    %127 = vmatpush.msra.mxu0 0.0
    %128 = vmatpush.msra.mxu0 0.0
    %129 = vmatpush.msra.mxu0 0.0
    %130 = vmatpush.msra.mxu0 0.0
    %131 = vmatpush.msra.mxu0 %v115
    %132 = vmatpush.msra.mxu0 %v114
    %133 = vmatpush.msra.mxu0 %v113
    %134 = vmatpush.msra.mxu0 %v112
    %135 = vmatpush.msra.mxu0 %v111
    %136 = vmatpush.msra.mxu0 %v110
    %137 = vmatpush.msra.mxu0 %v109
    %138 = vmatpush.msra.mxu0 %v108
    %139 = vmatmul.f32.gmra.mxu0 %v118
    %v140 = vpop.f32.mrf.mxu0
    %v141 = vadd.f32 0.0, %v140
    %142 = vmatmul.f32.gmra.mxu0 %v121
    %v143 = vpop.f32.mrf.mxu0
    %v144 = vadd.f32 0.0, %v143
    %145 = vdwg.mxu0
    %v147 = vsel %vm116, %v95, 0
    %v150 = vsel %vm116, %v96, 0
    %152 = vmatpush.msra.mxu0 0.0
    %153 = vmatpush.msra.mxu0 0.0
    %154 = vmatpush.msra.mxu0 0.0
    %155 = vmatpush.msra.mxu0 0.0
    %156 = vmatpush.msra.mxu0 0.0
    %157 = vmatpush.msra.mxu0 0.0
    %158 = vmatpush.msra.mxu0 0.0
    %159 = vmatpush.msra.mxu0 0.0
    %160 = vmatpush.msra.mxu0 %v104
    %161 = vmatpush.msra.mxu0 %v103
    %162 = vmatpush.msra.mxu0 %v102
    %163 = vmatpush.msra.mxu0 %v101
    %164 = vmatpush.msra.mxu0 %v100
    %165 = vmatpush.msra.mxu0 %v99
    %166 = vmatpush.msra.mxu0 %v98
    %167 = vmatpush.msra.mxu0 %v97
    %168 = vmatmul.f32.gmra.mxu0 %v147
    %v169 = vpop.f32.mrf.mxu0
    %v170 = vadd.f32 %v141, %v169
    %171 = vmatmul.f32.gmra.mxu0 %v150
    %v172 = vpop.f32.mrf.mxu0
    %v173 = vadd.f32 %v144, %v172
    %174 = vdwg.mxu0
    %v175 = vld [vmem:[%s0 + $0x2] sm:$0xff]
    %v176 = vld [vmem:[%s0 + $0xa] sm:$0xff]
    %s177 = scalar_lea.vmem [#allocation4], 128
    %v178 = vld [vmem:[%s177] sm:$0xff]
    %v179 = vld [vmem:[%s177 + $0x8] sm:$0xff]
    %v180 = vld [vmem:[%s177 + $0x10] sm:$0xff]
    %v181 = vld [vmem:[%s177 + $0x18] sm:$0xff]
    %v182 = vld [vmem:[%s177 + $0x20] sm:$0xff]
    %v183 = vld [vmem:[%s177 + $0x28] sm:$0xff]
    %v184 = vld [vmem:[%s177 + $0x30] sm:$0xff]
    %v185 = vld [vmem:[%s177 + $0x38] sm:$0xff]
    %v187 = vsel %vm116, %v175, 0
    %v190 = vsel %vm116, %v176, 0
    %192 = vmatpush.msra.mxu0 0.0
    %193 = vmatpush.msra.mxu0 0.0
    %194 = vmatpush.msra.mxu0 0.0
    %195 = vmatpush.msra.mxu0 0.0
    %196 = vmatpush.msra.mxu0 0.0
    %197 = vmatpush.msra.mxu0 0.0
    %198 = vmatpush.msra.mxu0 0.0
    %199 = vmatpush.msra.mxu0 0.0
    %200 = vmatpush.msra.mxu0 %v185
    %201 = vmatpush.msra.mxu0 %v184
    %202 = vmatpush.msra.mxu0 %v183
    %203 = vmatpush.msra.mxu0 %v182
    %204 = vmatpush.msra.mxu0 %v181
    %205 = vmatpush.msra.mxu0 %v180
    %206 = vmatpush.msra.mxu0 %v179
    %207 = vmatpush.msra.mxu0 %v178
    %208 = vmatmul.f32.gmra.mxu0 %v187
    %v209 = vpop.f32.mrf.mxu0
    %v210 = vadd.f32 0.0, %v209
    %211 = vmatmul.f32.gmra.mxu0 %v190
    %v212 = vpop.f32.mrf.mxu0
    %v213 = vadd.f32 0.0, %v212
    %214 = vdwg.mxu0
    %v215 = vadd.f32 %v170, %v210
    %v216 = vadd.f32 %v173, %v213
    %v218 = vperm.slane %v91, 0
    %v220 = vadd.f32 %v215, %v218
    %v221 = vadd.f32 %v216, %v218
    %v222 = vmax.f32 %v220, 0.0
    %v223 = vmax.f32 %v221, 0.0
    %224 = vst [vmem:[#allocation2 + $0x1] sm:$0xff] %v222
    %225 = vst [vmem:[#allocation2 + $0x9] sm:$0xff] %v223
    %v226 = vld [vmem:[#allocation2] sm:$0xff]
    %v227 = vld [vmem:[#allocation2 + $0x8] sm:$0xff]
    %v228 = vld [vmem:[%s2] sm:$0xff]
    %v229 = vld [vmem:[%s2 + $0x8] sm:$0xff]
    %v230 = vld [vmem:[%s2 + $0x10] sm:$0xff]
    %v231 = vld [vmem:[%s2 + $0x18] sm:$0xff]
    %v232 = vld [vmem:[%s2 + $0x20] sm:$0xff]
    %v233 = vld [vmem:[%s2 + $0x28] sm:$0xff]
    %v234 = vld [vmem:[%s2 + $0x30] sm:$0xff]
    %v235 = vld [vmem:[%s2 + $0x38] sm:$0xff]
    %v236 = vld [vmem:[%s2 + $0x40] sm:$0xff]
    %v237 = vld [vmem:[%s2 + $0x48] sm:$0xff]
    %v238 = vld [vmem:[%s2 + $0x50] sm:$0xff]
    %v239 = vld [vmem:[%s2 + $0x58] sm:$0xff]
    %v240 = vld [vmem:[%s2 + $0x60] sm:$0xff]
    %v241 = vld [vmem:[%s2 + $0x68] sm:$0xff]
    %v242 = vld [vmem:[%s2 + $0x70] sm:$0xff]
    %v243 = vld [vmem:[%s2 + $0x78] sm:$0xff]
    %v244 = vld [vmem:[#allocation2 + $0x1] sm:$0xff]
    %v245 = vld [vmem:[#allocation2 + $0x9] sm:$0xff]
    %s246 = scalar_lea.vmem %s2, 128
    %v247 = vld [vmem:[%s246] sm:$0xff]
    %v248 = vld [vmem:[%s246 + $0x8] sm:$0xff]
    %v249 = vld [vmem:[%s246 + $0x10] sm:$0xff]
    %v250 = vld [vmem:[%s246 + $0x18] sm:$0xff]
    %v251 = vld [vmem:[%s246 + $0x20] sm:$0xff]
    %v252 = vld [vmem:[%s246 + $0x28] sm:$0xff]
    %v253 = vld [vmem:[%s246 + $0x30] sm:$0xff]
    %v254 = vld [vmem:[%s246 + $0x38] sm:$0xff]
    %v255 = vld [vmem:[%s246 + $0x40] sm:$0xff]
    %v256 = vld [vmem:[%s246 + $0x48] sm:$0xff]
    %v257 = vld [vmem:[%s246 + $0x50] sm:$0xff]
    %v258 = vld [vmem:[%s246 + $0x58] sm:$0xff]
    %v259 = vld [vmem:[%s246 + $0x60] sm:$0xff]
    %v260 = vld [vmem:[%s246 + $0x68] sm:$0xff]
    %v261 = vld [vmem:[%s246 + $0x70] sm:$0xff]
    %v262 = vld [vmem:[%s246 + $0x78] sm:$0xff]
    %263 = vmatpush.msra.mxu0 %v262
    %264 = vmatpush.msra.mxu0 %v261
    %265 = vmatpush.msra.mxu0 %v260
    %266 = vmatpush.msra.mxu0 %v259
    %267 = vmatpush.msra.mxu0 %v258
    %268 = vmatpush.msra.mxu0 %v257
    %269 = vmatpush.msra.mxu0 %v256
    %270 = vmatpush.msra.mxu0 %v255
    %271 = vmatpush.msra.mxu0 %v254
    %272 = vmatpush.msra.mxu0 %v253
    %273 = vmatpush.msra.mxu0 %v252
    %274 = vmatpush.msra.mxu0 %v251
    %275 = vmatpush.msra.mxu0 %v250
    %276 = vmatpush.msra.mxu0 %v249
    %277 = vmatpush.msra.mxu0 %v248
    %278 = vmatpush.msra.mxu0 %v247
    %279 = vmatmul.f32.gmra.mxu0 %v244
    %v280 = vpop.f32.mrf.mxu0
    %v281 = vadd.f32 0.0, %v280
    %282 = vmatmul.f32.gmra.mxu0 %v245
    %v283 = vpop.f32.mrf.mxu0
    %v284 = vadd.f32 0.0, %v283
    %285 = vdwg.mxu0
    %286 = vmatpush.msra.mxu0 %v243
    %287 = vmatpush.msra.mxu0 %v242
    %288 = vmatpush.msra.mxu0 %v241
    %289 = vmatpush.msra.mxu0 %v240
    %290 = vmatpush.msra.mxu0 %v239
    %291 = vmatpush.msra.mxu0 %v238
    %292 = vmatpush.msra.mxu0 %v237
    %293 = vmatpush.msra.mxu0 %v236
    %294 = vmatpush.msra.mxu0 %v235
    %295 = vmatpush.msra.mxu0 %v234
    %296 = vmatpush.msra.mxu0 %v233
    %297 = vmatpush.msra.mxu0 %v232
    %298 = vmatpush.msra.mxu0 %v231
    %299 = vmatpush.msra.mxu0 %v230
    %300 = vmatpush.msra.mxu0 %v229
    %301 = vmatpush.msra.mxu0 %v228
    %302 = vmatmul.f32.gmra.mxu0 %v226
    %v303 = vpop.f32.mrf.mxu0
    %v304 = vadd.f32 %v281, %v303
    %305 = vmatmul.f32.gmra.mxu0 %v227
    %v306 = vpop.f32.mrf.mxu0
    %v307 = vadd.f32 %v284, %v306
    %308 = vdwg.mxu0
    %v309 = vld [vmem:[#allocation2 + $0x2] sm:$0xff]
    %v310 = vld [vmem:[#allocation2 + $0xa] sm:$0xff]
    %s311 = scalar_lea.vmem %s2, 256
    %v312 = vld [vmem:[%s311] sm:$0xff]
    %v313 = vld [vmem:[%s311 + $0x8] sm:$0xff]
    %v314 = vld [vmem:[%s311 + $0x10] sm:$0xff]
    %v315 = vld [vmem:[%s311 + $0x18] sm:$0xff]
    %v316 = vld [vmem:[%s311 + $0x20] sm:$0xff]
    %v317 = vld [vmem:[%s311 + $0x28] sm:$0xff]
    %v318 = vld [vmem:[%s311 + $0x30] sm:$0xff]
    %v319 = vld [vmem:[%s311 + $0x38] sm:$0xff]
    %v320 = vld [vmem:[%s311 + $0x40] sm:$0xff]
    %v321 = vld [vmem:[%s311 + $0x48] sm:$0xff]
    %v322 = vld [vmem:[%s311 + $0x50] sm:$0xff]
    %v323 = vld [vmem:[%s311 + $0x58] sm:$0xff]
    %v324 = vld [vmem:[%s311 + $0x60] sm:$0xff]
    %v325 = vld [vmem:[%s311 + $0x68] sm:$0xff]
    %v326 = vld [vmem:[%s311 + $0x70] sm:$0xff]
    %v327 = vld [vmem:[%s311 + $0x78] sm:$0xff]
    %328 = vmatpush.msra.mxu0 %v327
    %329 = vmatpush.msra.mxu0 %v326
    %330 = vmatpush.msra.mxu0 %v325
    %331 = vmatpush.msra.mxu0 %v324
    %332 = vmatpush.msra.mxu0 %v323
    %333 = vmatpush.msra.mxu0 %v322
    %334 = vmatpush.msra.mxu0 %v321
    %335 = vmatpush.msra.mxu0 %v320
    %336 = vmatpush.msra.mxu0 %v319
    %337 = vmatpush.msra.mxu0 %v318
    %338 = vmatpush.msra.mxu0 %v317
    %339 = vmatpush.msra.mxu0 %v316
    %340 = vmatpush.msra.mxu0 %v315
    %341 = vmatpush.msra.mxu0 %v314
    %342 = vmatpush.msra.mxu0 %v313
    %343 = vmatpush.msra.mxu0 %v312
    %344 = vmatmul.f32.gmra.mxu0 %v309
    %v345 = vpop.f32.mrf.mxu0
    %v346 = vadd.f32 0.0, %v345
    %347 = vmatmul.f32.gmra.mxu0 %v310
    %v348 = vpop.f32.mrf.mxu0
    %v349 = vadd.f32 0.0, %v348
    %350 = vdwg.mxu0
    %v351 = vadd.f32 %v304, %v346
    %v352 = vadd.f32 %v307, %v349
    %v354 = vperm.slane %v92, 0
    %v356 = vadd.f32 %v351, %v354
    %v357 = vadd.f32 %v352, %v354
    %v358 = vmax.f32 %v356, 0.0
    %v359 = vmax.f32 %v357, 0.0
    %360 = vst [vmem:[#allocation3 + $0x1] sm:$0xff] %v358
    %361 = vst [vmem:[#allocation3 + $0x9] sm:$0xff] %v359
    %v362 = vld [vmem:[#allocation3] sm:$0xff]
    %v363 = vld [vmem:[#allocation3 + $0x8] sm:$0xff]
    %v364 = vld [vmem:[#allocation6] sm:$0xff]
    %v365 = vld [vmem:[#allocation6 + $0x8] sm:$0xff]
    %v366 = vld [vmem:[#allocation6 + $0x10] sm:$0xff]
    %v367 = vld [vmem:[#allocation6 + $0x18] sm:$0xff]
    %v368 = vld [vmem:[#allocation6 + $0x20] sm:$0xff]
    %v369 = vld [vmem:[#allocation6 + $0x28] sm:$0xff]
    %v370 = vld [vmem:[#allocation6 + $0x30] sm:$0xff]
    %v371 = vld [vmem:[#allocation6 + $0x38] sm:$0xff]
    %v372 = vld [vmem:[#allocation6 + $0x40] sm:$0xff]
    %v373 = vld [vmem:[#allocation6 + $0x48] sm:$0xff]
    %v374 = vld [vmem:[#allocation6 + $0x50] sm:$0xff]
    %v375 = vld [vmem:[#allocation6 + $0x58] sm:$0xff]
    %v376 = vld [vmem:[#allocation6 + $0x60] sm:$0xff]
    %v377 = vld [vmem:[#allocation6 + $0x68] sm:$0xff]
    %v378 = vld [vmem:[#allocation6 + $0x70] sm:$0xff]
    %v379 = vld [vmem:[#allocation6 + $0x78] sm:$0xff]
    %v380 = vld [vmem:[#allocation3 + $0x1] sm:$0xff]
    %v381 = vld [vmem:[#allocation3 + $0x9] sm:$0xff]
    %s382 = scalar_lea.vmem [#allocation6], 128
    %v383 = vld [vmem:[%s382] sm:$0xff]
    %v384 = vld [vmem:[%s382 + $0x8] sm:$0xff]
    %v385 = vld [vmem:[%s382 + $0x10] sm:$0xff]
    %v386 = vld [vmem:[%s382 + $0x18] sm:$0xff]
    %v387 = vld [vmem:[%s382 + $0x20] sm:$0xff]
    %v388 = vld [vmem:[%s382 + $0x28] sm:$0xff]
    %v389 = vld [vmem:[%s382 + $0x30] sm:$0xff]
    %v390 = vld [vmem:[%s382 + $0x38] sm:$0xff]
    %v391 = vld [vmem:[%s382 + $0x40] sm:$0xff]
    %v392 = vld [vmem:[%s382 + $0x48] sm:$0xff]
    %v393 = vld [vmem:[%s382 + $0x50] sm:$0xff]
    %v394 = vld [vmem:[%s382 + $0x58] sm:$0xff]
    %v395 = vld [vmem:[%s382 + $0x60] sm:$0xff]
    %v396 = vld [vmem:[%s382 + $0x68] sm:$0xff]
    %v397 = vld [vmem:[%s382 + $0x70] sm:$0xff]
    %v398 = vld [vmem:[%s382 + $0x78] sm:$0xff]
    %399 = vmatpush.msra.mxu0 %v398
    %400 = vmatpush.msra.mxu0 %v397
    %401 = vmatpush.msra.mxu0 %v396
    %402 = vmatpush.msra.mxu0 %v395
    %403 = vmatpush.msra.mxu0 %v394
    %404 = vmatpush.msra.mxu0 %v393
    %405 = vmatpush.msra.mxu0 %v392
    %406 = vmatpush.msra.mxu0 %v391
    %407 = vmatpush.msra.mxu0 %v390
    %408 = vmatpush.msra.mxu0 %v389
    %409 = vmatpush.msra.mxu0 %v388
    %410 = vmatpush.msra.mxu0 %v387
    %411 = vmatpush.msra.mxu0 %v386
    %412 = vmatpush.msra.mxu0 %v385
    %413 = vmatpush.msra.mxu0 %v384
    %414 = vmatpush.msra.mxu0 %v383
    %415 = vmatmul.f32.gmra.mxu0 %v380
    %v416 = vpop.f32.mrf.mxu0
    %v417 = vadd.f32 0.0, %v416
    %418 = vmatmul.f32.gmra.mxu0 %v381
    %v419 = vpop.f32.mrf.mxu0
    %v420 = vadd.f32 0.0, %v419
    %421 = vdwg.mxu0
    %422 = vmatpush.msra.mxu0 %v379
    %423 = vmatpush.msra.mxu0 %v378
    %424 = vmatpush.msra.mxu0 %v377
    %425 = vmatpush.msra.mxu0 %v376
    %426 = vmatpush.msra.mxu0 %v375
    %427 = vmatpush.msra.mxu0 %v374
    %428 = vmatpush.msra.mxu0 %v373
    %429 = vmatpush.msra.mxu0 %v372
    %430 = vmatpush.msra.mxu0 %v371
    %431 = vmatpush.msra.mxu0 %v370
    %432 = vmatpush.msra.mxu0 %v369
    %433 = vmatpush.msra.mxu0 %v368
    %434 = vmatpush.msra.mxu0 %v367
    %435 = vmatpush.msra.mxu0 %v366
    %436 = vmatpush.msra.mxu0 %v365
    %437 = vmatpush.msra.mxu0 %v364
    %438 = vmatmul.f32.gmra.mxu0 %v362
    %v439 = vpop.f32.mrf.mxu0
    %v440 = vadd.f32 %v417, %v439
    %441 = vmatmul.f32.gmra.mxu0 %v363
    %v442 = vpop.f32.mrf.mxu0
    %v443 = vadd.f32 %v420, %v442
    %444 = vdwg.mxu0
    %v445 = vld [vmem:[#allocation3 + $0x2] sm:$0xff]
    %v446 = vld [vmem:[#allocation3 + $0xa] sm:$0xff]
    %s447 = scalar_lea.vmem [#allocation6], 256
    %v448 = vld [vmem:[%s447] sm:$0xff]
    %v449 = vld [vmem:[%s447 + $0x8] sm:$0xff]
    %v450 = vld [vmem:[%s447 + $0x10] sm:$0xff]
    %v451 = vld [vmem:[%s447 + $0x18] sm:$0xff]
    %v452 = vld [vmem:[%s447 + $0x20] sm:$0xff]
    %v453 = vld [vmem:[%s447 + $0x28] sm:$0xff]
    %v454 = vld [vmem:[%s447 + $0x30] sm:$0xff]
    %v455 = vld [vmem:[%s447 + $0x38] sm:$0xff]
    %v456 = vld [vmem:[%s447 + $0x40] sm:$0xff]
    %v457 = vld [vmem:[%s447 + $0x48] sm:$0xff]
    %v458 = vld [vmem:[%s447 + $0x50] sm:$0xff]
    %v459 = vld [vmem:[%s447 + $0x58] sm:$0xff]
    %v460 = vld [vmem:[%s447 + $0x60] sm:$0xff]
    %v461 = vld [vmem:[%s447 + $0x68] sm:$0xff]
    %v462 = vld [vmem:[%s447 + $0x70] sm:$0xff]
    %v463 = vld [vmem:[%s447 + $0x78] sm:$0xff]
    %464 = vmatpush.msra.mxu0 %v463
    %465 = vmatpush.msra.mxu0 %v462
    %466 = vmatpush.msra.mxu0 %v461
    %467 = vmatpush.msra.mxu0 %v460
    %468 = vmatpush.msra.mxu0 %v459
    %469 = vmatpush.msra.mxu0 %v458
    %470 = vmatpush.msra.mxu0 %v457
    %471 = vmatpush.msra.mxu0 %v456
    %472 = vmatpush.msra.mxu0 %v455
    %473 = vmatpush.msra.mxu0 %v454
    %474 = vmatpush.msra.mxu0 %v453
    %475 = vmatpush.msra.mxu0 %v452
    %476 = vmatpush.msra.mxu0 %v451
    %477 = vmatpush.msra.mxu0 %v450
    %478 = vmatpush.msra.mxu0 %v449
    %479 = vmatpush.msra.mxu0 %v448
    %480 = vmatmul.f32.gmra.mxu0 %v445
    %v481 = vpop.f32.mrf.mxu0
    %v482 = vadd.f32 0.0, %v481
    %483 = vmatmul.f32.gmra.mxu0 %v446
    %v484 = vpop.f32.mrf.mxu0
    %v485 = vadd.f32 0.0, %v484
    %486 = vdwg.mxu0
    %v487 = vadd.f32 %v440, %v482
    %v488 = vadd.f32 %v443, %v485
    %v490 = vperm.slane %v93, 0
    %v492 = vadd.f32 %v487, %v490
    %v493 = vadd.f32 %v488, %v490
    %v494 = vmax.f32 %v492, 0.0
    %v495 = vmax.f32 %v493, 0.0
    %v496 = vadd.f32 %v222, %v494
    %v497 = vadd.f32 %v223, %v495
    %v498 = vld [vmem:[#allocation8] sm:$0xff]
    %v499 = vld [vmem:[#allocation8 + $0x8] sm:$0xff]
    %v500 = vld [vmem:[#allocation8 + $0x10] sm:$0xff]
    %v501 = vld [vmem:[#allocation8 + $0x18] sm:$0xff]
    %v502 = vld [vmem:[#allocation8 + $0x20] sm:$0xff]
    %v503 = vld [vmem:[#allocation8 + $0x28] sm:$0xff]
    %v504 = vld [vmem:[#allocation8 + $0x30] sm:$0xff]
    %v505 = vld [vmem:[#allocation8 + $0x38] sm:$0xff]
    %v506 = vld [vmem:[#allocation8 + $0x40] sm:$0xff]
    %v507 = vld [vmem:[#allocation8 + $0x48] sm:$0xff]
    %v508 = vld [vmem:[#allocation8 + $0x50] sm:$0xff]
    %v509 = vld [vmem:[#allocation8 + $0x58] sm:$0xff]
    %v510 = vld [vmem:[#allocation8 + $0x60] sm:$0xff]
    %v511 = vld [vmem:[#allocation8 + $0x68] sm:$0xff]
    %v512 = vld [vmem:[#allocation8 + $0x70] sm:$0xff]
    %v513 = vld [vmem:[#allocation8 + $0x78] sm:$0xff]
    %v515 = vperm.slane %v94, 0
    %517 = vmatpush.msra.mxu0 %v513
    %518 = vmatpush.msra.mxu0 %v512
    %519 = vmatpush.msra.mxu0 %v511
    %520 = vmatpush.msra.mxu0 %v510
    %521 = vmatpush.msra.mxu0 %v509
    %522 = vmatpush.msra.mxu0 %v508
    %523 = vmatpush.msra.mxu0 %v507
    %524 = vmatpush.msra.mxu0 %v506
    %525 = vmatpush.msra.mxu0 %v505
    %526 = vmatpush.msra.mxu0 %v504
    %527 = vmatpush.msra.mxu0 %v503
    %528 = vmatpush.msra.mxu0 %v502
    %529 = vmatpush.msra.mxu0 %v501
    %530 = vmatpush.msra.mxu0 %v500
    %531 = vmatpush.msra.mxu0 %v499
    %532 = vmatpush.msra.mxu0 %v498
    %533 = vmatmul.f32.gmra.mxu0 %v496
    %v534 = vpop.f32.mrf.mxu0
    %v535 = vadd.f32 %v515, %v534
    %536 = vmatmul.f32.gmra.mxu0 %v497
    %v537 = vpop.f32.mrf.mxu0
    %v538 = vadd.f32 %v515, %v537
    %539 = vdwg.mxu0
    %540 = vst [vmem:[%s9] sm:$0xff] %v535
    %541 = vst [vmem:[%s9 + $0x8] sm:$0xff] %v538
    %s542 = scalar_lea.vmem %s0, 24
    %v543 = vld [vmem:[%s542] sm:$0xff]
    %v544 = vld [vmem:[%s542 + $0x8] sm:$0xff]
    %v545 = vld [vmem:[#allocation4] sm:$0xff]
    %v546 = vld [vmem:[#allocation4 + $0x8] sm:$0xff]
    %v547 = vld [vmem:[#allocation4 + $0x10] sm:$0xff]
    %v548 = vld [vmem:[#allocation4 + $0x18] sm:$0xff]
    %v549 = vld [vmem:[#allocation4 + $0x20] sm:$0xff]
    %v550 = vld [vmem:[#allocation4 + $0x28] sm:$0xff]
    %v551 = vld [vmem:[#allocation4 + $0x30] sm:$0xff]
    %v552 = vld [vmem:[#allocation4 + $0x38] sm:$0xff]
    %v553 = vld [vmem:[%s542 + $0x1] sm:$0xff]
    %v554 = vld [vmem:[%s542 + $0x9] sm:$0xff]
    %v555 = vld [vmem:[%s107] sm:$0xff]
    %v556 = vld [vmem:[%s107 + $0x8] sm:$0xff]
    %v557 = vld [vmem:[%s107 + $0x10] sm:$0xff]
    %v558 = vld [vmem:[%s107 + $0x18] sm:$0xff]
    %v559 = vld [vmem:[%s107 + $0x20] sm:$0xff]
    %v560 = vld [vmem:[%s107 + $0x28] sm:$0xff]
    %v561 = vld [vmem:[%s107 + $0x30] sm:$0xff]
    %v562 = vld [vmem:[%s107 + $0x38] sm:$0xff]
    %v564 = vsel %vm116, %v553, 0
    %v567 = vsel %vm116, %v554, 0
    %569 = vmatpush.msra.mxu0 0.0
    %570 = vmatpush.msra.mxu0 0.0
    %571 = vmatpush.msra.mxu0 0.0
    %572 = vmatpush.msra.mxu0 0.0
    %573 = vmatpush.msra.mxu0 0.0
    %574 = vmatpush.msra.mxu0 0.0
    %575 = vmatpush.msra.mxu0 0.0
    %576 = vmatpush.msra.mxu0 0.0
    %577 = vmatpush.msra.mxu0 %v562
    %578 = vmatpush.msra.mxu0 %v561
    %579 = vmatpush.msra.mxu0 %v560
    %580 = vmatpush.msra.mxu0 %v559
    %581 = vmatpush.msra.mxu0 %v558
    %582 = vmatpush.msra.mxu0 %v557
    %583 = vmatpush.msra.mxu0 %v556
    %584 = vmatpush.msra.mxu0 %v555
    %585 = vmatmul.f32.gmra.mxu0 %v564
    %v586 = vpop.f32.mrf.mxu0
    %v587 = vadd.f32 0.0, %v586
    %588 = vmatmul.f32.gmra.mxu0 %v567
    %v589 = vpop.f32.mrf.mxu0
    %v590 = vadd.f32 0.0, %v589
    %591 = vdwg.mxu0
    %v593 = vsel %vm116, %v543, 0
    %v596 = vsel %vm116, %v544, 0
    %598 = vmatpush.msra.mxu0 0.0
    %599 = vmatpush.msra.mxu0 0.0
    %600 = vmatpush.msra.mxu0 0.0
    %601 = vmatpush.msra.mxu0 0.0
    %602 = vmatpush.msra.mxu0 0.0
    %603 = vmatpush.msra.mxu0 0.0
    %604 = vmatpush.msra.mxu0 0.0
    %605 = vmatpush.msra.mxu0 0.0
    %606 = vmatpush.msra.mxu0 %v552
    %607 = vmatpush.msra.mxu0 %v551
    %608 = vmatpush.msra.mxu0 %v550
    %609 = vmatpush.msra.mxu0 %v549
    %610 = vmatpush.msra.mxu0 %v548
    %611 = vmatpush.msra.mxu0 %v547
    %612 = vmatpush.msra.mxu0 %v546
    %613 = vmatpush.msra.mxu0 %v545
    %614 = vmatmul.f32.gmra.mxu0 %v593
    %v615 = vpop.f32.mrf.mxu0
    %v616 = vadd.f32 %v587, %v615
    %617 = vmatmul.f32.gmra.mxu0 %v596
    %v618 = vpop.f32.mrf.mxu0
    %v619 = vadd.f32 %v590, %v618
    %620 = vdwg.mxu0
    %v621 = vld [vmem:[%s542 + $0x2] sm:$0xff]
    %v622 = vld [vmem:[%s542 + $0xa] sm:$0xff]
    %v623 = vld [vmem:[%s177] sm:$0xff]
    %v624 = vld [vmem:[%s177 + $0x8] sm:$0xff]
    %v625 = vld [vmem:[%s177 + $0x10] sm:$0xff]
    %v626 = vld [vmem:[%s177 + $0x18] sm:$0xff]
    %v627 = vld [vmem:[%s177 + $0x20] sm:$0xff]
    %v628 = vld [vmem:[%s177 + $0x28] sm:$0xff]
    %v629 = vld [vmem:[%s177 + $0x30] sm:$0xff]
    %v630 = vld [vmem:[%s177 + $0x38] sm:$0xff]
    %v632 = vsel %vm116, %v621, 0
    %v635 = vsel %vm116, %v622, 0
    %637 = vmatpush.msra.mxu0 0.0
    %638 = vmatpush.msra.mxu0 0.0
    %639 = vmatpush.msra.mxu0 0.0
    %640 = vmatpush.msra.mxu0 0.0
    %641 = vmatpush.msra.mxu0 0.0
    %642 = vmatpush.msra.mxu0 0.0
    %643 = vmatpush.msra.mxu0 0.0
    %644 = vmatpush.msra.mxu0 0.0
    %645 = vmatpush.msra.mxu0 %v630
    %646 = vmatpush.msra.mxu0 %v629
    %647 = vmatpush.msra.mxu0 %v628
    %648 = vmatpush.msra.mxu0 %v627
    %649 = vmatpush.msra.mxu0 %v626
    %650 = vmatpush.msra.mxu0 %v625
    %651 = vmatpush.msra.mxu0 %v624
    %652 = vmatpush.msra.mxu0 %v623
    %653 = vmatmul.f32.gmra.mxu0 %v632
    %v654 = vpop.f32.mrf.mxu0
    %v655 = vadd.f32 0.0, %v654
    %656 = vmatmul.f32.gmra.mxu0 %v635
    %v657 = vpop.f32.mrf.mxu0
    %v658 = vadd.f32 0.0, %v657
    %659 = vdwg.mxu0
    %v660 = vadd.f32 %v616, %v655
    %v661 = vadd.f32 %v619, %v658
    %v662 = vadd.f32 %v660, %v218
    %v663 = vadd.f32 %v661, %v218
    %v664 = vmax.f32 %v662, 0.0
    %v665 = vmax.f32 %v663, 0.0
    %s666 = scalar_lea.vmem [#allocation2], 24
    %667 = vst [vmem:[%s666 + $0x1] sm:$0xff] %v664
    %668 = vst [vmem:[%s666 + $0x9] sm:$0xff] %v665
    %v669 = vld [vmem:[%s666] sm:$0xff]
    %v670 = vld [vmem:[%s666 + $0x8] sm:$0xff]
    %v671 = vld [vmem:[%s2] sm:$0xff]
    %v672 = vld [vmem:[%s2 + $0x8] sm:$0xff]
    %v673 = vld [vmem:[%s2 + $0x10] sm:$0xff]
    %v674 = vld [vmem:[%s2 + $0x18] sm:$0xff]
    %v675 = vld [vmem:[%s2 + $0x20] sm:$0xff]
    %v676 = vld [vmem:[%s2 + $0x28] sm:$0xff]
    %v677 = vld [vmem:[%s2 + $0x30] sm:$0xff]
    %v678 = vld [vmem:[%s2 + $0x38] sm:$0xff]
    %v679 = vld [vmem:[%s2 + $0x40] sm:$0xff]
    %v680 = vld [vmem:[%s2 + $0x48] sm:$0xff]
    %v681 = vld [vmem:[%s2 + $0x50] sm:$0xff]
    %v682 = vld [vmem:[%s2 + $0x58] sm:$0xff]
    %v683 = vld [vmem:[%s2 + $0x60] sm:$0xff]
    %v684 = vld [vmem:[%s2 + $0x68] sm:$0xff]
    %v685 = vld [vmem:[%s2 + $0x70] sm:$0xff]
    %v686 = vld [vmem:[%s2 + $0x78] sm:$0xff]
    %v687 = vld [vmem:[%s666 + $0x1] sm:$0xff]
    %v688 = vld [vmem:[%s666 + $0x9] sm:$0xff]
    %v689 = vld [vmem:[%s246] sm:$0xff]
    %v690 = vld [vmem:[%s246 + $0x8] sm:$0xff]
    %v691 = vld [vmem:[%s246 + $0x10] sm:$0xff]
    %v692 = vld [vmem:[%s246 + $0x18] sm:$0xff]
    %v693 = vld [vmem:[%s246 + $0x20] sm:$0xff]
    %v694 = vld [vmem:[%s246 + $0x28] sm:$0xff]
    %v695 = vld [vmem:[%s246 + $0x30] sm:$0xff]
    %v696 = vld [vmem:[%s246 + $0x38] sm:$0xff]
    %v697 = vld [vmem:[%s246 + $0x40] sm:$0xff]
    %v698 = vld [vmem:[%s246 + $0x48] sm:$0xff]
    %v699 = vld [vmem:[%s246 + $0x50] sm:$0xff]
    %v700 = vld [vmem:[%s246 + $0x58] sm:$0xff]
    %v701 = vld [vmem:[%s246 + $0x60] sm:$0xff]
    %v702 = vld [vmem:[%s246 + $0x68] sm:$0xff]
    %v703 = vld [vmem:[%s246 + $0x70] sm:$0xff]
    %v704 = vld [vmem:[%s246 + $0x78] sm:$0xff]
    %705 = vmatpush.msra.mxu0 %v704
    %706 = vmatpush.msra.mxu0 %v703
    %707 = vmatpush.msra.mxu0 %v702
    %708 = vmatpush.msra.mxu0 %v701
    %709 = vmatpush.msra.mxu0 %v700
    %710 = vmatpush.msra.mxu0 %v699
    %711 = vmatpush.msra.mxu0 %v698
    %712 = vmatpush.msra.mxu0 %v697
    %713 = vmatpush.msra.mxu0 %v696
    %714 = vmatpush.msra.mxu0 %v695
    %715 = vmatpush.msra.mxu0 %v694
    %716 = vmatpush.msra.mxu0 %v693
    %717 = vmatpush.msra.mxu0 %v692
    %718 = vmatpush.msra.mxu0 %v691
    %719 = vmatpush.msra.mxu0 %v690
    %720 = vmatpush.msra.mxu0 %v689
    %721 = vmatmul.f32.gmra.mxu0 %v687
    %v722 = vpop.f32.mrf.mxu0
    %v723 = vadd.f32 0.0, %v722
    %724 = vmatmul.f32.gmra.mxu0 %v688
    %v725 = vpop.f32.mrf.mxu0
    %v726 = vadd.f32 0.0, %v725
    %727 = vdwg.mxu0
    %728 = vmatpush.msra.mxu0 %v686
    %729 = vmatpush.msra.mxu0 %v685
    %730 = vmatpush.msra.mxu0 %v684
    %731 = vmatpush.msra.mxu0 %v683
    %732 = vmatpush.msra.mxu0 %v682
    %733 = vmatpush.msra.mxu0 %v681
    %734 = vmatpush.msra.mxu0 %v680
    %735 = vmatpush.msra.mxu0 %v679
    %736 = vmatpush.msra.mxu0 %v678
    %737 = vmatpush.msra.mxu0 %v677
    %738 = vmatpush.msra.mxu0 %v676
    %739 = vmatpush.msra.mxu0 %v675
    %740 = vmatpush.msra.mxu0 %v674
    %741 = vmatpush.msra.mxu0 %v673
    %742 = vmatpush.msra.mxu0 %v672
    %743 = vmatpush.msra.mxu0 %v671
    %744 = vmatmul.f32.gmra.mxu0 %v669
    %v745 = vpop.f32.mrf.mxu0
    %v746 = vadd.f32 %v723, %v745
    %747 = vmatmul.f32.gmra.mxu0 %v670
    %v748 = vpop.f32.mrf.mxu0
    %v749 = vadd.f32 %v726, %v748
    %750 = vdwg.mxu0
    %v751 = vld [vmem:[%s666 + $0x2] sm:$0xff]
    %v752 = vld [vmem:[%s666 + $0xa] sm:$0xff]
    %v753 = vld [vmem:[%s311] sm:$0xff]
    %v754 = vld [vmem:[%s311 + $0x8] sm:$0xff]
    %v755 = vld [vmem:[%s311 + $0x10] sm:$0xff]
    %v756 = vld [vmem:[%s311 + $0x18] sm:$0xff]
    %v757 = vld [vmem:[%s311 + $0x20] sm:$0xff]
    %v758 = vld [vmem:[%s311 + $0x28] sm:$0xff]
    %v759 = vld [vmem:[%s311 + $0x30] sm:$0xff]
    %v760 = vld [vmem:[%s311 + $0x38] sm:$0xff]
    %v761 = vld [vmem:[%s311 + $0x40] sm:$0xff]
    %v762 = vld [vmem:[%s311 + $0x48] sm:$0xff]
    %v763 = vld [vmem:[%s311 + $0x50] sm:$0xff]
    %v764 = vld [vmem:[%s311 + $0x58] sm:$0xff]
    %v765 = vld [vmem:[%s311 + $0x60] sm:$0xff]
    %v766 = vld [vmem:[%s311 + $0x68] sm:$0xff]
    %v767 = vld [vmem:[%s311 + $0x70] sm:$0xff]
    %v768 = vld [vmem:[%s311 + $0x78] sm:$0xff]
    %769 = vmatpush.msra.mxu0 %v768
    %770 = vmatpush.msra.mxu0 %v767
    %771 = vmatpush.msra.mxu0 %v766
    %772 = vmatpush.msra.mxu0 %v765
    %773 = vmatpush.msra.mxu0 %v764
    %774 = vmatpush.msra.mxu0 %v763
    %775 = vmatpush.msra.mxu0 %v762
    %776 = vmatpush.msra.mxu0 %v761
    %777 = vmatpush.msra.mxu0 %v760
    %778 = vmatpush.msra.mxu0 %v759
    %779 = vmatpush.msra.mxu0 %v758
    %780 = vmatpush.msra.mxu0 %v757
    %781 = vmatpush.msra.mxu0 %v756
    %782 = vmatpush.msra.mxu0 %v755
    %783 = vmatpush.msra.mxu0 %v754
    %784 = vmatpush.msra.mxu0 %v753
    %785 = vmatmul.f32.gmra.mxu0 %v751
    %v786 = vpop.f32.mrf.mxu0
    %v787 = vadd.f32 0.0, %v786
    %788 = vmatmul.f32.gmra.mxu0 %v752
    %v789 = vpop.f32.mrf.mxu0
    %v790 = vadd.f32 0.0, %v789
    %791 = vdwg.mxu0
    %v792 = vadd.f32 %v746, %v787
    %v793 = vadd.f32 %v749, %v790
    %v794 = vadd.f32 %v792, %v354
    %v795 = vadd.f32 %v793, %v354
    %v796 = vmax.f32 %v794, 0.0
    %v797 = vmax.f32 %v795, 0.0
    %s798 = scalar_lea.vmem [#allocation3], 24
    %799 = vst [vmem:[%s798 + $0x1] sm:$0xff] %v796
    %800 = vst [vmem:[%s798 + $0x9] sm:$0xff] %v797
    %v801 = vld [vmem:[%s798] sm:$0xff]
    %v802 = vld [vmem:[%s798 + $0x8] sm:$0xff]
    %v803 = vld [vmem:[#allocation6] sm:$0xff]
    %v804 = vld [vmem:[#allocation6 + $0x8] sm:$0xff]
    %v805 = vld [vmem:[#allocation6 + $0x10] sm:$0xff]
    %v806 = vld [vmem:[#allocation6 + $0x18] sm:$0xff]
    %v807 = vld [vmem:[#allocation6 + $0x20] sm:$0xff]
    %v808 = vld [vmem:[#allocation6 + $0x28] sm:$0xff]
    %v809 = vld [vmem:[#allocation6 + $0x30] sm:$0xff]
    %v810 = vld [vmem:[#allocation6 + $0x38] sm:$0xff]
    %v811 = vld [vmem:[#allocation6 + $0x40] sm:$0xff]
    %v812 = vld [vmem:[#allocation6 + $0x48] sm:$0xff]
    %v813 = vld [vmem:[#allocation6 + $0x50] sm:$0xff]
    %v814 = vld [vmem:[#allocation6 + $0x58] sm:$0xff]
    %v815 = vld [vmem:[#allocation6 + $0x60] sm:$0xff]
    %v816 = vld [vmem:[#allocation6 + $0x68] sm:$0xff]
    %v817 = vld [vmem:[#allocation6 + $0x70] sm:$0xff]
    %v818 = vld [vmem:[#allocation6 + $0x78] sm:$0xff]
    %v819 = vld [vmem:[%s798 + $0x1] sm:$0xff]
    %v820 = vld [vmem:[%s798 + $0x9] sm:$0xff]
    %v821 = vld [vmem:[%s382] sm:$0xff]
    %v822 = vld [vmem:[%s382 + $0x8] sm:$0xff]
    %v823 = vld [vmem:[%s382 + $0x10] sm:$0xff]
    %v824 = vld [vmem:[%s382 + $0x18] sm:$0xff]
    %v825 = vld [vmem:[%s382 + $0x20] sm:$0xff]
    %v826 = vld [vmem:[%s382 + $0x28] sm:$0xff]
    %v827 = vld [vmem:[%s382 + $0x30] sm:$0xff]
    %v828 = vld [vmem:[%s382 + $0x38] sm:$0xff]
    %v829 = vld [vmem:[%s382 + $0x40] sm:$0xff]
    %v830 = vld [vmem:[%s382 + $0x48] sm:$0xff]
    %v831 = vld [vmem:[%s382 + $0x50] sm:$0xff]
    %v832 = vld [vmem:[%s382 + $0x58] sm:$0xff]
    %v833 = vld [vmem:[%s382 + $0x60] sm:$0xff]
    %v834 = vld [vmem:[%s382 + $0x68] sm:$0xff]
    %v835 = vld [vmem:[%s382 + $0x70] sm:$0xff]
    %v836 = vld [vmem:[%s382 + $0x78] sm:$0xff]
    %837 = vmatpush.msra.mxu0 %v836
    %838 = vmatpush.msra.mxu0 %v835
    %839 = vmatpush.msra.mxu0 %v834
    %840 = vmatpush.msra.mxu0 %v833
    %841 = vmatpush.msra.mxu0 %v832
    %842 = vmatpush.msra.mxu0 %v831
    %843 = vmatpush.msra.mxu0 %v830
    %844 = vmatpush.msra.mxu0 %v829
    %845 = vmatpush.msra.mxu0 %v828
    %846 = vmatpush.msra.mxu0 %v827
    %847 = vmatpush.msra.mxu0 %v826
    %848 = vmatpush.msra.mxu0 %v825
    %849 = vmatpush.msra.mxu0 %v824
    %850 = vmatpush.msra.mxu0 %v823
    %851 = vmatpush.msra.mxu0 %v822
    %852 = vmatpush.msra.mxu0 %v821
    %853 = vmatmul.f32.gmra.mxu0 %v819
    %v854 = vpop.f32.mrf.mxu0
    %v855 = vadd.f32 0.0, %v854
    %856 = vmatmul.f32.gmra.mxu0 %v820
    %v857 = vpop.f32.mrf.mxu0
    %v858 = vadd.f32 0.0, %v857
    %859 = vdwg.mxu0
    %860 = vmatpush.msra.mxu0 %v818
    %861 = vmatpush.msra.mxu0 %v817
    %862 = vmatpush.msra.mxu0 %v816
    %863 = vmatpush.msra.mxu0 %v815
    %864 = vmatpush.msra.mxu0 %v814
    %865 = vmatpush.msra.mxu0 %v813
    %866 = vmatpush.msra.mxu0 %v812
    %867 = vmatpush.msra.mxu0 %v811
    %868 = vmatpush.msra.mxu0 %v810
    %869 = vmatpush.msra.mxu0 %v809
    %870 = vmatpush.msra.mxu0 %v808
    %871 = vmatpush.msra.mxu0 %v807
    %872 = vmatpush.msra.mxu0 %v806
    %873 = vmatpush.msra.mxu0 %v805
    %874 = vmatpush.msra.mxu0 %v804
    %875 = vmatpush.msra.mxu0 %v803
    %876 = vmatmul.f32.gmra.mxu0 %v801
    %v877 = vpop.f32.mrf.mxu0
    %v878 = vadd.f32 %v855, %v877
    %879 = vmatmul.f32.gmra.mxu0 %v802
    %v880 = vpop.f32.mrf.mxu0
    %v881 = vadd.f32 %v858, %v880
    %882 = vdwg.mxu0
    %v883 = vld [vmem:[%s798 + $0x2] sm:$0xff]
    %v884 = vld [vmem:[%s798 + $0xa] sm:$0xff]
    %v885 = vld [vmem:[%s447] sm:$0xff]
    %v886 = vld [vmem:[%s447 + $0x8] sm:$0xff]
    %v887 = vld [vmem:[%s447 + $0x10] sm:$0xff]
    %v888 = vld [vmem:[%s447 + $0x18] sm:$0xff]
    %v889 = vld [vmem:[%s447 + $0x20] sm:$0xff]
    %v890 = vld [vmem:[%s447 + $0x28] sm:$0xff]
    %v891 = vld [vmem:[%s447 + $0x30] sm:$0xff]
    %v892 = vld [vmem:[%s447 + $0x38] sm:$0xff]
    %v893 = vld [vmem:[%s447 + $0x40] sm:$0xff]
    %v894 = vld [vmem:[%s447 + $0x48] sm:$0xff]
    %v895 = vld [vmem:[%s447 + $0x50] sm:$0xff]
    %v896 = vld [vmem:[%s447 + $0x58] sm:$0xff]
    %v897 = vld [vmem:[%s447 + $0x60] sm:$0xff]
    %v898 = vld [vmem:[%s447 + $0x68] sm:$0xff]
    %v899 = vld [vmem:[%s447 + $0x70] sm:$0xff]
    %v900 = vld [vmem:[%s447 + $0x78] sm:$0xff]
    %901 = vmatpush.msra.mxu0 %v900
    %902 = vmatpush.msra.mxu0 %v899
    %903 = vmatpush.msra.mxu0 %v898
    %904 = vmatpush.msra.mxu0 %v897
    %905 = vmatpush.msra.mxu0 %v896
    %906 = vmatpush.msra.mxu0 %v895
    %907 = vmatpush.msra.mxu0 %v894
    %908 = vmatpush.msra.mxu0 %v893
    %909 = vmatpush.msra.mxu0 %v892
    %910 = vmatpush.msra.mxu0 %v891
    %911 = vmatpush.msra.mxu0 %v890
    %912 = vmatpush.msra.mxu0 %v889
    %913 = vmatpush.msra.mxu0 %v888
    %914 = vmatpush.msra.mxu0 %v887
    %915 = vmatpush.msra.mxu0 %v886
    %916 = vmatpush.msra.mxu0 %v885
    %917 = vmatmul.f32.gmra.mxu0 %v883
    %v918 = vpop.f32.mrf.mxu0
    %v919 = vadd.f32 0.0, %v918
    %920 = vmatmul.f32.gmra.mxu0 %v884
    %v921 = vpop.f32.mrf.mxu0
    %v922 = vadd.f32 0.0, %v921
    %923 = vdwg.mxu0
    %v924 = vadd.f32 %v878, %v919
    %v925 = vadd.f32 %v881, %v922
    %v926 = vadd.f32 %v924, %v490
    %v927 = vadd.f32 %v925, %v490
    %v928 = vmax.f32 %v926, 0.0
    %v929 = vmax.f32 %v927, 0.0
    %v930 = vadd.f32 %v664, %v928
    %v931 = vadd.f32 %v665, %v929
    %v932 = vld [vmem:[#allocation8] sm:$0xff]
    %v933 = vld [vmem:[#allocation8 + $0x8] sm:$0xff]
    %v934 = vld [vmem:[#allocation8 + $0x10] sm:$0xff]
    %v935 = vld [vmem:[#allocation8 + $0x18] sm:$0xff]
    %v936 = vld [vmem:[#allocation8 + $0x20] sm:$0xff]
    %v937 = vld [vmem:[#allocation8 + $0x28] sm:$0xff]
    %v938 = vld [vmem:[#allocation8 + $0x30] sm:$0xff]
    %v939 = vld [vmem:[#allocation8 + $0x38] sm:$0xff]
    %v940 = vld [vmem:[#allocation8 + $0x40] sm:$0xff]
    %v941 = vld [vmem:[#allocation8 + $0x48] sm:$0xff]
    %v942 = vld [vmem:[#allocation8 + $0x50] sm:$0xff]
    %v943 = vld [vmem:[#allocation8 + $0x58] sm:$0xff]
    %v944 = vld [vmem:[#allocation8 + $0x60] sm:$0xff]
    %v945 = vld [vmem:[#allocation8 + $0x68] sm:$0xff]
    %v946 = vld [vmem:[#allocation8 + $0x70] sm:$0xff]
    %v947 = vld [vmem:[#allocation8 + $0x78] sm:$0xff]
    %948 = vmatpush.msra.mxu0 %v947
    %949 = vmatpush.msra.mxu0 %v946
    %950 = vmatpush.msra.mxu0 %v945
    %951 = vmatpush.msra.mxu0 %v944
    %952 = vmatpush.msra.mxu0 %v943
    %953 = vmatpush.msra.mxu0 %v942
    %954 = vmatpush.msra.mxu0 %v941
    %955 = vmatpush.msra.mxu0 %v940
    %956 = vmatpush.msra.mxu0 %v939
    %957 = vmatpush.msra.mxu0 %v938
    %958 = vmatpush.msra.mxu0 %v937
    %959 = vmatpush.msra.mxu0 %v936
    %960 = vmatpush.msra.mxu0 %v935
    %961 = vmatpush.msra.mxu0 %v934
    %962 = vmatpush.msra.mxu0 %v933
    %963 = vmatpush.msra.mxu0 %v932
    %964 = vmatmul.f32.gmra.mxu0 %v930
    %v965 = vpop.f32.mrf.mxu0
    %v966 = vadd.f32 %v515, %v965
    %967 = vmatmul.f32.gmra.mxu0 %v931
    %v968 = vpop.f32.mrf.mxu0
    %v969 = vadd.f32 %v515, %v968
    %970 = vdwg.mxu0
    %s971 = scalar_lea.vmem %s9, 16
    %972 = vst [vmem:[%s971] sm:$0xff] %v966
    %973 = vst [vmem:[%s971 + $0x8] sm:$0xff] %v969
    // Predicated region
    $region50: #{architecture_forward.1} parent=1 // pred_check
      _
    $region51: #{architecture_forward.1} parent=1 // pred_check_branch
      %975 = sbr.rel (0) target = $region53
    $region52: #{architecture_forward.1} parent=1 // pred_region
      _
    $region53: #{architecture_forward.1} parent=1 // pred_fallthru
      _
    // Predicated region
    $region54: #{architecture_forward.1} parent=1 // pred_check
      _
    $region55: #{architecture_forward.1} parent=1 // pred_check_branch
      %977 = sbr.rel (0) target = $region57
    $region56: #{architecture_forward.1} parent=1 // pred_region
      _
    $region57: #{architecture_forward.1} parent=1 // pred_fallthru
      _
    %978 = vsyncpa [#allocation5], 1
    %979 = vsyncpa [#allocation7], 1

</llo_original>
